<compile_context>
chip_gen: v5e
topology: v5e:2x2
jax: 0.10.0
libtpu: 0.0.40
codegen_flags: <defaults>
</compile_context>

<pallas_src>
import jax
import jax.numpy as jnp
from jax.experimental import pallas as pl
from jax.experimental.pallas import tpu as pltpu


def _round_up(x, m):
    return (x + m - 1) // m * m


def make_textcnn_kernel(tb, max_len, e, max_fs, k_pad, nf_pad):
    rows = tb * max_len
    k_raw = max_fs * e

    def kernel(x_ref, w_ref, b_ref, m_ref, lw_ref, lb_ref, out_ref):
        # x_ref : (tb, Lmax, E)   bf16    w_ref : (k_pad, nf_pad) bf16
        # b_ref : (1, nf_pad)     f32     m_ref : (Lmax, nf_pad)  f32
        # lw_ref: (nf_pad, c_pad) bf16    lb_ref: (1, c_pad)      f32
        # out_ref: (tb, c_pad)    f32
        x2 = x_ref[...].reshape(rows, e)        # collapse (tb, Lmax) -> rows

        # In-kernel im2col: piece j holds row r+j at row r (sublane roll).
        # INVARIANT: x beyond a sample's true length is zero (wrapper/mask
        # guarantees this), and wrapped rows land at within-sample positions
        # t >= Lmax - j >= l_out(fs) for every filter with a nonzero tap j
        # (j <= fs - 1); the pooling mask zeroes those positions, so neither
        # the wrap nor the padding contaminates the result.
        pieces = [x2]
        if max_fs > 1:
            # 32-bit copy: the native XLU rotate path for sublane rolls.
            x2f = x2.astype(jnp.float32)
            for j in range(1, max_fs):
                shifted = pltpu.roll(x2f, rows - j, axis=0)  # row r <- row r+j
                pieces.append(shifted.astype(x2.dtype))
        if k_pad > k_raw:
            pieces.append(jnp.zeros((rows, k_pad - k_raw), x2.dtype))
        lhs = jnp.concatenate(pieces, axis=-1)   # (rows, k_pad) bf16

        # One full-depth MXU matmul replaces max_fs K=E matmuls + f32 adds:
        # the tap accumulation happens inside the MXU.
        acc = jnp.dot(lhs, w_ref[...], preferred_element_type=jnp.float32)

        # Conv bias + ReLU (f32).
        acc = jnp.maximum(acc + b_ref[...], 0.0)

        # Adaptive average pool: per-column mask carries 1/l_out and zeros for
        # invalid sequence positions / padded feature columns.
        acc3 = acc.reshape(tb, max_len, nf_pad)
        pooled = jnp.sum(acc3 * m_ref[...][None, :, :], axis=1)  # (tb, nf_pad)

        # dropout(p=0) is the identity.  Final linear: bf16 MXU operands,
        # f32 accumulation, lane-dense (tb, c_pad) output block.
        logits = jnp.dot(pooled.astype(lw_ref.dtype), lw_ref[...],
                         preferred_element_type=jnp.float32) + lb_ref[...]
        out_ref[...] = logits.astype(out_ref.dtype)

    return kernel


def _vmem_bytes(tb, max_len, e, max_fs, k_pad, nf_pad, c_pad):
    """Conservative per-step VMEM footprint estimate (bytes)."""
    rows = tb * max_len
    resident = (k_pad * nf_pad * 2          # packed conv weight (bf16)
                + nf_pad * 4                # conv bias
                + max_len * nf_pad * 4      # pooling mask
                + nf_pad * c_pad * 2        # linear weight (bf16)
                + c_pad * 4)                # linear bias
    per_step = (2 * rows * e * 2            # x block, double-buffered bf16
                + rows * e * 4              # f32 copy used for the rolls
                + (max_fs - 1) * rows * e * 2   # rolled bf16 pieces
                + rows * k_pad * 2          # im2col LHS
                + 2 * rows * nf_pad * 4     # conv acc + masked copy (f32)
                + tb * nf_pad * 6           # pooled f32 + bf16 copy
                + 2 * tb * c_pad * 4)       # logits block, double-buffered
    return resident + per_step


def _vmem_budget():
    try:
        cap = pltpu.get_tpu_info().vmem_capacity_bytes
    except Exception:
        cap = 64 << 20          # smallest per-core VMEM across v5e/v6e/v7x
    # Use at most ~60% of physical VMEM for this kernel's scoped allocation
    # (well above the 16/32 MiB default scoped limits, with headroom left).
    return max(32 << 20, min(int(cap * 0.6), 80 << 20))


def _choose_tb(batch, max_len, e, max_fs, k_pad, nf_pad, c_pad, budget,
               tb_cap=512):
    b8 = _round_up(max(batch, 1), 8)
    tb = max(8, min(tb_cap, b8) // 8 * 8)
    # Shrink until the estimated footprint fits the VMEM budget.
    while tb > 8 and _vmem_bytes(tb, max_len, e, max_fs,
                                 k_pad, nf_pad, c_pad) > budget:
        tb -= 8
    # Keep a multi-step grid (>=2, ideally >=4) so the "parallel" batch axis
    # can be sharded across v7x's two TensorCores and the pipeline stays busy.
    if b8 >= 16:
        want_steps = 4 if b8 >= 64 else 2
        tb = min(tb, max(8, (b8 // want_steps) // 8 * 8))
    return tb


def textcnn_forward(x_emb, conv_params, linear_w, linear_b,
                    filter_sizes, max_len, num_filters, num_classes, tb=None):
    """x_emb: (B, Lmax, E) float32, already embedded / masked / zero-padded.

    Positions beyond a sample's true length MUST be zero (the PyTorch module
    guarantees this via the mask multiply + maxLength zero-padding); the
    pooling mask relies on that invariant.
    """
    b, lmax, e = x_emb.shape
    assert lmax == max_len
    n = len(filter_sizes)
    max_fs = max(filter_sizes)
    assert all(1 <= fs <= max_len for fs in filter_sizes), \
        "every filter size must satisfy 1 <= fs <= maxLength"
    nf = n * num_filters
    nf_pad = _round_up(nf, 128)             # lane-dense conv feature columns
    c_pad = _round_up(num_classes, 128)     # lane-dense logits
    k_raw = max_fs * e
    k_pad = _round_up(k_raw, 128)           # fused contraction depth

    budget = _vmem_budget()
    if tb is None:
        tb = _choose_tb(b, max_len, e, max_fs, k_pad, nf_pad, c_pad, budget)
    tb = max(8, min(tb, _round_up(b, 8)) // 8 * 8)
    b_pad = _round_up(b, tb)

    # Pack all filters' tap-j weights into one (k_pad, nf_pad) matrix:
    #   w_packed[j*E:(j+1)*E, i*F:(i+1)*F] = w_i[j]   (zero when fs_i <= j).
    # Bias and pooling mask share the same filter-major column layout,
    # matching torch.cat(features, dim=1).
    w_packed = jnp.zeros((k_pad, nf_pad), jnp.float32)
    bias_all = jnp.zeros((1, nf_pad), jnp.float32)
    mask = jnp.zeros((max_len, nf_pad), jnp.float32)
    for i, (fs, (w, bias)) in enumerate(zip(filter_sizes, conv_params)):
        c0 = i * num_filters
        w_packed = w_packed.at[:fs * e, c0:c0 + num_filters].set(
            w.reshape(fs * e, num_filters))
        bias_all = bias_all.at[:, c0:c0 + num_filters].set(bias)
        l_out = max_len - fs + 1
        mask = mask.at[:l_out, c0:c0 + num_filters].set(1.0 / l_out)

    lw_pad = jnp.zeros((nf_pad, c_pad), jnp.float32)
    lw_pad = lw_pad.at[:nf, :num_classes].set(linear_w)
    lb_pad = jnp.zeros((1, c_pad), jnp.float32)
    lb_pad = lb_pad.at[:, :num_classes].set(linear_b)

    x_p = x_emb
    if b_pad != b:
        x_p = jnp.pad(x_emb, ((0, b_pad - b), (0, 0), (0, 0)))
    # bf16 MXU operands (halves the dominant x DMA bytes); accumulation, bias,
    # relu, pooling and the logits output stay f32.
    x_p = x_p.astype(jnp.bfloat16)
    w_packed = w_packed.astype(jnp.bfloat16)
    lw_pad = lw_pad.astype(jnp.bfloat16)

    grid = (b_pad // tb,)
    kernel = make_textcnn_kernel(tb, max_len, e, max_fs, k_pad, nf_pad)

    def _resident(shape):
        # Grid-invariant operand: constant index map, single-buffered.
        return pl.BlockSpec(shape, lambda *_: (0,) * len(shape),
                            pipeline_mode=pl.Buffered(1))

    out = pl.pallas_call(
        kernel,
        out_shape=jax.ShapeDtypeStruct((b_pad, c_pad), jnp.float32),
        grid_spec=pltpu.PrefetchScalarGridSpec(
            num_scalar_prefetch=0,
            grid=grid,
            in_specs=[
                pl.BlockSpec((tb, max_len, e), lambda i: (i, 0, 0)),
                _resident((k_pad, nf_pad)),
                _resident((1, nf_pad)),
                _resident((max_len, nf_pad)),
                _resident((nf_pad, c_pad)),
                _resident((1, c_pad)),
            ],
            out_specs=pl.BlockSpec((tb, c_pad), lambda i: (i, 0)),
        ),
        compiler_params=pltpu.CompilerParams(
            dimension_semantics=("parallel",),
            vmem_limit_bytes=int(budget)),
    )(x_p, w_packed, bias_all, mask, lw_pad, lb_pad)
    return out[:b, :num_classes]                                 # (B, C)


def reference_forward(x_emb, conv_params, linear_w, linear_b,
                      filter_sizes, max_len, num_filters):
    feats = []
    for fs, (w, bias) in zip(filter_sizes, conv_params):
        l_out = max_len - fs + 1
        acc = jnp.zeros((x_emb.shape[0], l_out, num_filters), jnp.float32)
        for j in range(fs):
            acc = acc + jnp.einsum('ble,ef->blf',
                                   x_emb[:, j:j + l_out, :], w[j])
        acc = jax.nn.relu(acc + bias[None])
        feats.append(jnp.mean(acc, axis=1))
    feature = jnp.concatenate(feats, axis=1)
    return feature @ linear_w + linear_b


if __name__ == "__main__":
    # Small, deterministic configuration consistent with TextCNNParameter.
    vocab_size = 50          # len(encodeDict)
    embedding_dim = 32       # embeddingDim
    num_filters = 32         # numFilters
    filter_sizes = [2, 3, 4, 5, 5]   # filterSizeList (default)
    max_length = 16          # maxLength
    num_classes = 8          # datasetInfo.numClasses
    batch, seq_len = 16, 8

    key = jax.random.PRNGKey(0)
    keys = jax.random.split(key, 4 + 2 * len(filter_sizes))

    emb_table = jax.random.normal(keys[0], (vocab_size, embedding_dim),
                                  jnp.float32) * 0.1
    conv_params = []
    for i, fs in enumerate(filter_sizes):
        # torch Conv2d weight (F, 1, fs, E) -> stored as (fs, E, F)
        w = jax.random.normal(keys[1 + 2 * i],
                              (fs, embedding_dim, num_filters),
                              jnp.float32) * 0.1
        bias = jax.random.normal(keys[2 + 2 * i], (1, num_filters),
                                 jnp.float32) * 0.1
        conv_params.append((w, bias))
    total_f = len(filter_sizes) * num_filters
    # torch Linear weight (C, n*F) -> stored transposed as (n*F, C)
    linear_w = jax.random.normal(keys[-2], (total_f, num_classes),
                                 jnp.float32) * 0.1
    linear_b = jax.random.normal(keys[-1], (1, num_classes), jnp.float32) * 0.1

    # Input token ids (inputDict['text']); no mask -> mask == ones.
    tokens = jax.random.randint(keys[-3], (batch, seq_len), 0, vocab_size,
                                jnp.int32)

    # TODO(synk): embedding gather + mask multiply + maxLength zero-padding are
    # plain-JAX glue (XLA) outside the Pallas kernel, matching the module's
    # pre-conv preprocessing.
    x_emb = jnp.take(emb_table, tokens, axis=0)                  # (B, L, E)
    x_emb = jnp.pad(x_emb, ((0, 0), (0, max_length - seq_len), (0, 0)))

    # tb is auto-selected (footprint-aware, multi-step grid); for this tiny
    # config it resolves to tb=8 -> grid=(2,), exercising the batch pipeline.
    out = textcnn_forward(x_emb, conv_params, linear_w, linear_b,
                          filter_sizes, max_length, num_filters, num_classes)
    out = jax.block_until_ready(out)

    ref = reference_forward(x_emb, conv_params, linear_w, linear_b,
                            filter_sizes, max_length, num_filters)
    assert out.shape == (batch, num_classes)
    assert jnp.allclose(out, ref, rtol=2e-2, atol=2e-2)

    print("KERNEL_OK")
</pallas_src>

<mosaic_0001>
module attributes {stable_mosaic.version = 11 : i64} {
  func.func @kernel(%arg0: i32, %arg1: memref<8x16x32xbf16, #tpu.memory_space<vmem>>, %arg2: memref<256x256xbf16, #tpu.memory_space<vmem>>, %arg3: memref<1x256xf32, #tpu.memory_space<vmem>>, %arg4: memref<16x256xf32, #tpu.memory_space<vmem>>, %arg5: memref<256x128xbf16, #tpu.memory_space<vmem>>, %arg6: memref<1x128xf32, #tpu.memory_space<vmem>>, %arg7: memref<8x128xf32, #tpu.memory_space<vmem>>) attributes {dimension_semantics = [#tpu.dimension_semantics<parallel>], iteration_bounds = array<i64: 2>, scalar_prefetch = 0 : i64, scratch_operands = 0 : i64, tpu.core_type = #tpu.core_type<tc>, window_params = [{transform_indices = @transform_0, window_bounds = array<i64: 8, 16, 32>}, {pipeline_mode = #tpu.pipeline_mode<synchronous>, transform_indices = @transform_1, window_bounds = array<i64: 256, 256>}, {pipeline_mode = #tpu.pipeline_mode<synchronous>, transform_indices = @transform_2, window_bounds = array<i64: 1, 256>}, {pipeline_mode = #tpu.pipeline_mode<synchronous>, transform_indices = @transform_3, window_bounds = array<i64: 16, 256>}, {pipeline_mode = #tpu.pipeline_mode<synchronous>, transform_indices = @transform_4, window_bounds = array<i64: 256, 128>}, {pipeline_mode = #tpu.pipeline_mode<synchronous>, transform_indices = @transform_5, window_bounds = array<i64: 1, 128>}, {transform_indices = @transform_6, window_bounds = array<i64: 8, 128>}]} {
    %c0 = arith.constant 0 : index
    %c0_0 = arith.constant 0 : index
    %c0_1 = arith.constant 0 : index
    %0 = vector.load %arg1[%c0, %c0_0, %c0_1] : memref<8x16x32xbf16, #tpu.memory_space<vmem>>, vector<8x16x32xbf16>
    %1 = vector.shape_cast %0 : vector<8x16x32xbf16> to vector<128x32xbf16>
    %2 = arith.extf %1 : vector<128x32xbf16> to vector<128x32xf32>
    %c127_i32 = arith.constant 127 : i32
    %3 = tpu.dynamic_rotate %2 by %c127_i32 dim 0 : vector<128x32xf32>, i32 -> vector<128x32xf32>
    %4 = arith.truncf %3 : vector<128x32xf32> to vector<128x32xbf16>
    %c126_i32 = arith.constant 126 : i32
    %5 = tpu.dynamic_rotate %2 by %c126_i32 dim 0 : vector<128x32xf32>, i32 -> vector<128x32xf32>
    %6 = arith.truncf %5 : vector<128x32xf32> to vector<128x32xbf16>
    %c125_i32 = arith.constant 125 : i32
    %7 = tpu.dynamic_rotate %2 by %c125_i32 dim 0 : vector<128x32xf32>, i32 -> vector<128x32xf32>
    %8 = arith.truncf %7 : vector<128x32xf32> to vector<128x32xbf16>
    %c124_i32 = arith.constant 124 : i32
    %9 = tpu.dynamic_rotate %2 by %c124_i32 dim 0 : vector<128x32xf32>, i32 -> vector<128x32xf32>
    %10 = arith.truncf %9 : vector<128x32xf32> to vector<128x32xbf16>
    %cst = arith.constant 0.000000e+00 : bf16
    %11 = vector.broadcast %cst : bf16 to vector<128x96xbf16>
    %12 = tpu.concatenate %1, %4, %6, %8, %10, %11 in 1 : vector<128x32xbf16>, vector<128x32xbf16>, vector<128x32xbf16>, vector<128x32xbf16>, vector<128x32xbf16>, vector<128x96xbf16> -> vector<128x256xbf16>
    %c0_2 = arith.constant 0 : index
    %c0_3 = arith.constant 0 : index
    %13 = vector.load %arg2[%c0_2, %c0_3] : memref<256x256xbf16, #tpu.memory_space<vmem>>, vector<256x256xbf16>
    %cst_4 = arith.constant dense<0.000000e+00> : vector<128x256xf32>
    %14 = tpu.matmul %12, %13, %cst_4 {dimension_numbers = #tpu.dot_dimension_numbers<[1], [0], [0], [1], [0, 0, 1, 1], [], []>} : vector<128x256xbf16>, vector<256x256xbf16>, vector<128x256xf32> -> vector<128x256xf32>
    %c0_5 = arith.constant 0 : index
    %c0_6 = arith.constant 0 : index
    %15 = vector.load %arg3[%c0_5, %c0_6] : memref<1x256xf32, #tpu.memory_space<vmem>>, vector<1x256xf32>
    %16 = vector.broadcast %15 : vector<1x256xf32> to vector<128x256xf32>
    %17 = arith.addf %14, %16 : vector<128x256xf32>
    %cst_7 = arith.constant 0.000000e+00 : f32
    %18 = vector.broadcast %cst_7 : f32 to vector<128x256xf32>
    %19 = arith.maximumf %17, %18 : vector<128x256xf32>
    %20 = vector.shape_cast %19 : vector<128x256xf32> to vector<8x16x256xf32>
    %c0_8 = arith.constant 0 : index
    %c0_9 = arith.constant 0 : index
    %21 = vector.load %arg4[%c0_8, %c0_9] : memref<16x256xf32, #tpu.memory_space<vmem>>, vector<16x256xf32>
    %22 = vector.shape_cast %21 : vector<16x256xf32> to vector<1x16x256xf32>
    %23 = vector.broadcast %22 : vector<1x16x256xf32> to vector<8x16x256xf32>
    %24 = arith.mulf %20, %23 : vector<8x16x256xf32>
    %cst_10 = arith.constant dense<0.000000e+00> : vector<8x256xf32>
    %25 = vector.multi_reduction <add>, %24, %cst_10 [1] : vector<8x16x256xf32> to vector<8x256xf32>
    %26 = arith.truncf %25 : vector<8x256xf32> to vector<8x256xbf16>
    %c0_11 = arith.constant 0 : index
    %c0_12 = arith.constant 0 : index
    %27 = vector.load %arg5[%c0_11, %c0_12] : memref<256x128xbf16, #tpu.memory_space<vmem>>, vector<256x128xbf16>
    %cst_13 = arith.constant dense<0.000000e+00> : vector<8x128xf32>
    %28 = tpu.matmul %26, %27, %cst_13 {dimension_numbers = #tpu.dot_dimension_numbers<[1], [0], [0], [1], [0, 0, 1, 1], [], []>} : vector<8x256xbf16>, vector<256x128xbf16>, vector<8x128xf32> -> vector<8x128xf32>
    %c0_14 = arith.constant 0 : index
    %c0_15 = arith.constant 0 : index
    %29 = vector.load %arg6[%c0_14, %c0_15] : memref<1x128xf32, #tpu.memory_space<vmem>>, vector<1x128xf32>
    %30 = vector.broadcast %29 : vector<1x128xf32> to vector<8x128xf32>
    %31 = arith.addf %28, %30 : vector<8x128xf32>
    %c0_16 = arith.constant 0 : index
    %c0_17 = arith.constant 0 : index
    %32 = vector.load %arg7[%c0_16, %c0_17] : memref<8x128xf32, #tpu.memory_space<vmem>>, vector<8x128xf32>
    tpu.vector_store %arg7[%c0_16, %c0_17], %31 {strides = array<i32>} : memref<8x128xf32, #tpu.memory_space<vmem>>, vector<8x128xf32>,
    return
  }
  func.func @transform_0(%arg0: i32) -> (i32, i32, i32) {
    %c0_i32 = arith.constant 0 : i32
    %c0_i32_0 = arith.constant 0 : i32
    %c0_i32_1 = arith.constant 0 : i32
    return %arg0, %c0_i32, %c0_i32_0 : i32, i32, i32
  }
  func.func @transform_1(%arg0: i32) -> (i32, i32) {
    %c0_i32 = arith.constant 0 : i32
    %c0_i32_0 = arith.constant 0 : i32
    %c0_i32_1 = arith.constant 0 : i32
    return %c0_i32, %c0_i32_0 : i32, i32
  }
  func.func @transform_2(%arg0: i32) -> (i32, i32) {
    %c0_i32 = arith.constant 0 : i32
    %c0_i32_0 = arith.constant 0 : i32
    %c0_i32_1 = arith.constant 0 : i32
    return %c0_i32, %c0_i32_0 : i32, i32
  }
  func.func @transform_3(%arg0: i32) -> (i32, i32) {
    %c0_i32 = arith.constant 0 : i32
    %c0_i32_0 = arith.constant 0 : i32
    %c0_i32_1 = arith.constant 0 : i32
    return %c0_i32, %c0_i32_0 : i32, i32
  }
  func.func @transform_4(%arg0: i32) -> (i32, i32) {
    %c0_i32 = arith.constant 0 : i32
    %c0_i32_0 = arith.constant 0 : i32
    %c0_i32_1 = arith.constant 0 : i32
    return %c0_i32, %c0_i32_0 : i32, i32
  }
  func.func @transform_5(%arg0: i32) -> (i32, i32) {
    %c0_i32 = arith.constant 0 : i32
    %c0_i32_0 = arith.constant 0 : i32
    %c0_i32_1 = arith.constant 0 : i32
    return %c0_i32, %c0_i32_0 : i32, i32
  }
  func.func @transform_6(%arg0: i32) -> (i32, i32) {
    %c0_i32 = arith.constant 0 : i32
    %c0_i32_0 = arith.constant 0 : i32
    return %arg0, %c0_i32 : i32, i32
  }
}

</mosaic_0001>

<llo_original>
// kernel: tpu_custom_call.1
$region0: #{tpu_custom_call.1}
  #allocation0 [shape = 'u32[]', space=smem, size = 0x4, offset = 0x4, fixed_abs, tag = 'smem constant byte address 0x4 - core index']
  #allocation1 [shape = 'u32[72,128]{1,0:T(1,128)}', space=vmem, size = 0x9000, scoped, tag = 'internal scratch']
  %s0 = inlined_call_operand.hbm [shape: bf16[16,16,32], index: 0, kind: input, shape index: {}]
  %s1 = inlined_call_operand.hbm [shape: bf16[256,256], index: 1, kind: input, shape index: {}]
  %s2 = inlined_call_operand.hbm [shape: f32[1,256], index: 2, kind: input, shape index: {}]
  %s3 = inlined_call_operand.hbm [shape: f32[16,256], index: 3, kind: input, shape index: {}]
  %s4 = inlined_call_operand.hbm [shape: bf16[256,128], index: 4, kind: input, shape index: {}]
  %s5 = inlined_call_operand.vmem [shape: f32[1,128], index: 5, kind: input, shape index: {}]
  %s6 = inlined_call_operand.hbm [shape: f32[16,128], index: 6, kind: output, shape index: {}]
  %s7 = sld [smem:[#allocation0]]
  $region77: #{tpu_custom_call.1} parent=0
    _
  %s9 = ssub.s32 1, %s7
  %s10 = scalar_select 0, %s9, %s7
  $region1: #{tpu_custom_call.1} parent=0
    #allocation2 [shape = 'u8[65536]{0}', space=vmem, size = 0x10000, scoped, tag = 'input window, operand 0']
    #allocation3 [shape = 's32[2]{0}', space=sflag, size = 0x8, scoped, tag = 'scoped memory for tpu_custom_call.1']
    #allocation4 [shape = 's32[2]{0}', space=sflag, size = 0x8, scoped, tag = 'scoped memory for tpu_custom_call.1']
    #allocation5 [shape = 'u8[131072]{0}', space=vmem, size = 0x20000, scoped, tag = 'input window, operand 1, single buffered']
    #allocation6 [shape = 's32[1]{0}', space=sflag, size = 0x4, scoped, tag = 'scoped memory for tpu_custom_call.1']
    #allocation7 [shape = 'u8[1024]{0}', space=vmem, size = 0x400, scoped, tag = 'input window, operand 2, single buffered']
    #allocation8 [shape = 'u8[16384]{0}', space=vmem, size = 0x4000, scoped, tag = 'input window, operand 3, single buffered']
    #allocation9 [shape = 's32[1]{0}', space=sflag, size = 0x4, scoped, tag = 'scoped memory for tpu_custom_call.1']
    #allocation10 [shape = 'u8[65536]{0}', space=vmem, size = 0x10000, scoped, tag = 'input window, operand 4, single buffered']
    #allocation11 [shape = 'u8[8192]{0}', space=vmem, size = 0x2000, scoped, tag = 'output window, operand 0']
    %11 = vsyncpa [#allocation3], 0
    %s12 = scalar_lea.sflag [#allocation3], 1
    %13 = vsyncpa %s12, 0
    %14 = vsyncpa [#allocation6], 0
    %15 = vsyncpa [#allocation9], 0
    %16 = vsyncpa [#allocation4], 0
    %s17 = scalar_lea.sflag [#allocation4], 1
    %18 = vsyncpa %s17, 0
    loop: start=0, step=1, limit=4
    $region2: #{tpu_custom_call.1} parent=1 // loop_pre_header
      _
    $region3: #{tpu_custom_call.1} parent=1 // loop_header
      %s20 = sphi 0, %s24
      %p21 = scmp.ge.s32.totalorder %s20, 4
      %s30 = sphi 0, %s32
      %s33 = sphi 0, %s30
      %s34 = sphi 0, %s33
      %s50 = sphi 0, %s34
      %s54 = sphi 0, %s54
      %s56 = sphi 0, %s54
      %s57 = sphi 0, %s56
      %s71 = sphi 0, %s57
      %s75 = sphi 0, %s75
      %s77 = sphi 0, %s75
      %s78 = sphi 0, %s77
      %s92 = sphi 0, %s78
      %s96 = sphi 0, %s96
      %s98 = sphi 0, %s96
      %s99 = sphi 0, %s98
      %s113 = sphi 0, %s99
      %s117 = sphi 0, %s117
      %s119 = sphi 0, %s117
      %s120 = sphi 0, %s119
      %s134 = sphi 0, %s120
      %s138 = sphi 0, %s138
      %s140 = sphi 0, %s138
      %s141 = sphi 0, %s140
      %s155 = sphi 0, %s141
      %s161 = sphi 0, %s163
      %s164 = sphi 0, %s161
      %s165 = sphi 0, %s164
      %s181 = sphi 0, %s165
    $region4: #{tpu_custom_call.1} parent=1 // loop_header_branch
      %23 = sbr.rel (%p21) target = $region8
    $region5: #{tpu_custom_call.1} parent=1 // loop_body
      %s25 = ssub.s32 %s20, 1
      %s26 = ssub.s32 %s20, 2
      %s27 = sadd.s32 %s20, 1
      %s28 = ssub.s32 %s20, %s27
      %p29 = scmp.eq.s32.totalorder %s28, 0
      %s31 = sadd.s32 %s30, 1
      %s32 = scalar_select %p29, %s30, %s31
      %p35 = pneg %p29
      %p36 = scmp.eq.s32.totalorder %s20, 1
      %p37 = por %p35, %p36
      %p38 = scmp.ne.s32.totalorder %s30, %s33
      %p39 = scmp.eq.s32.totalorder %s20, 0
      %p40 = por %p38, %p39
      %p41 = scmp.ne.s32.totalorder %s30, %s33
      %p42 = scmp.eq.s32.totalorder %s25, 1
      %p43 = por %p41, %p42
      %p44 = scmp.ne.s32.totalorder %s33, %s34
      %p45 = scmp.eq.s32.totalorder %s25, 0
      %p46 = por %p44, %p45
      %p47 = scmp.ne.s32.totalorder %s33, %s34
      %p48 = scmp.eq.s32.totalorder %s26, 1
      %p49 = por %p47, %p48
      %p51 = scmp.ne.s32.totalorder %s34, %s50
      %p52 = scmp.eq.s32.totalorder %s26, 0
      %p53 = por %p51, %p52
      %s55 = sadd.s32 %s54, 1
      %p58 = scmp.eq.s32.totalorder %s20, 1
      %p59 = scmp.ne.s32.totalorder %s54, %s56
      %p60 = scmp.eq.s32.totalorder %s20, 0
      %p61 = por %p59, %p60
      %p62 = scmp.ne.s32.totalorder %s54, %s56
      %p63 = scmp.eq.s32.totalorder %s25, 1
      %p64 = por %p62, %p63
      %p65 = scmp.ne.s32.totalorder %s56, %s57
      %p66 = scmp.eq.s32.totalorder %s25, 0
      %p67 = por %p65, %p66
      %p68 = scmp.ne.s32.totalorder %s56, %s57
      %p69 = scmp.eq.s32.totalorder %s26, 1
      %p70 = por %p68, %p69
      %p72 = scmp.ne.s32.totalorder %s57, %s71
      %p73 = scmp.eq.s32.totalorder %s26, 0
      %p74 = por %p72, %p73
      %s76 = sadd.s32 %s75, 1
      %p79 = scmp.eq.s32.totalorder %s20, 1
      %p80 = scmp.ne.s32.totalorder %s75, %s77
      %p81 = scmp.eq.s32.totalorder %s20, 0
      %p82 = por %p80, %p81
      %p83 = scmp.ne.s32.totalorder %s75, %s77
      %p84 = scmp.eq.s32.totalorder %s25, 1
      %p85 = por %p83, %p84
      %p86 = scmp.ne.s32.totalorder %s77, %s78
      %p87 = scmp.eq.s32.totalorder %s25, 0
      %p88 = por %p86, %p87
      %p89 = scmp.ne.s32.totalorder %s77, %s78
      %p90 = scmp.eq.s32.totalorder %s26, 1
      %p91 = por %p89, %p90
      %p93 = scmp.ne.s32.totalorder %s78, %s92
      %p94 = scmp.eq.s32.totalorder %s26, 0
      %p95 = por %p93, %p94
      %s97 = sadd.s32 %s96, 1
      %p100 = scmp.eq.s32.totalorder %s20, 1
      %p101 = scmp.ne.s32.totalorder %s96, %s98
      %p102 = scmp.eq.s32.totalorder %s20, 0
      %p103 = por %p101, %p102
      %p104 = scmp.ne.s32.totalorder %s96, %s98
      %p105 = scmp.eq.s32.totalorder %s25, 1
      %p106 = por %p104, %p105
      %p107 = scmp.ne.s32.totalorder %s98, %s99
      %p108 = scmp.eq.s32.totalorder %s25, 0
      %p109 = por %p107, %p108
      %p110 = scmp.ne.s32.totalorder %s98, %s99
      %p111 = scmp.eq.s32.totalorder %s26, 1
      %p112 = por %p110, %p111
      %p114 = scmp.ne.s32.totalorder %s99, %s113
      %p115 = scmp.eq.s32.totalorder %s26, 0
      %p116 = por %p114, %p115
      %s118 = sadd.s32 %s117, 1
      %p121 = scmp.eq.s32.totalorder %s20, 1
      %p122 = scmp.ne.s32.totalorder %s117, %s119
      %p123 = scmp.eq.s32.totalorder %s20, 0
      %p124 = por %p122, %p123
      %p125 = scmp.ne.s32.totalorder %s117, %s119
      %p126 = scmp.eq.s32.totalorder %s25, 1
      %p127 = por %p125, %p126
      %p128 = scmp.ne.s32.totalorder %s119, %s120
      %p129 = scmp.eq.s32.totalorder %s25, 0
      %p130 = por %p128, %p129
      %p131 = scmp.ne.s32.totalorder %s119, %s120
      %p132 = scmp.eq.s32.totalorder %s26, 1
      %p133 = por %p131, %p132
      %p135 = scmp.ne.s32.totalorder %s120, %s134
      %p136 = scmp.eq.s32.totalorder %s26, 0
      %p137 = por %p135, %p136
      %s139 = sadd.s32 %s138, 1
      %p142 = scmp.eq.s32.totalorder %s20, 1
      %p143 = scmp.ne.s32.totalorder %s138, %s140
      %p144 = scmp.eq.s32.totalorder %s20, 0
      %p145 = por %p143, %p144
      %p146 = scmp.ne.s32.totalorder %s138, %s140
      %p147 = scmp.eq.s32.totalorder %s25, 1
      %p148 = por %p146, %p147
      %p149 = scmp.ne.s32.totalorder %s140, %s141
      %p150 = scmp.eq.s32.totalorder %s25, 0
      %p151 = por %p149, %p150
      %p152 = scmp.ne.s32.totalorder %s140, %s141
      %p153 = scmp.eq.s32.totalorder %s26, 1
      %p154 = por %p152, %p153
      %p156 = scmp.ne.s32.totalorder %s141, %s155
      %p157 = scmp.eq.s32.totalorder %s26, 0
      %p158 = por %p156, %p157
      %s159 = ssub.s32 %s20, %s27
      %p160 = scmp.eq.s32.totalorder %s159, 0
      %s162 = sadd.s32 %s161, 1
      %s163 = scalar_select %p160, %s161, %s162
      %p166 = pneg %p160
      %p167 = scmp.eq.s32.totalorder %s20, 1
      %p168 = por %p166, %p167
      %p169 = scmp.ne.s32.totalorder %s161, %s164
      %p170 = scmp.eq.s32.totalorder %s20, 0
      %p171 = por %p169, %p170
      %p172 = scmp.ne.s32.totalorder %s161, %s164
      %p173 = scmp.eq.s32.totalorder %s25, 1
      %p174 = por %p172, %p173
      %p175 = scmp.ne.s32.totalorder %s164, %s165
      %p176 = scmp.eq.s32.totalorder %s25, 0
      %p177 = por %p175, %p176
      %p178 = scmp.ne.s32.totalorder %s164, %s165
      %p179 = scmp.eq.s32.totalorder %s26, 1
      %p180 = por %p178, %p179
      %p182 = scmp.ne.s32.totalorder %s165, %s181
      %p183 = scmp.eq.s32.totalorder %s26, 0
      %p184 = por %p182, %p183
      %p185 = scmp.le.s32.totalorder 1, %s20
      %p186 = scmp.lt.s32.totalorder %s20, 3
      %p187 = pnand %p185, %p186
      %p188 = pneg %p187
      // Predicated region
      $region9: #{tpu_custom_call.1} parent=5 // pred_check
        _
      $region10: #{tpu_custom_call.1} parent=5 // pred_check_branch
        %190 = sbr.rel (%p187) target = $region12
      $region11: #{tpu_custom_call.1} parent=5 // pred_region
        %s191 = ssub.s32 %s20, 1
        // Predicated region
        $region13: #{tpu_custom_call.1} parent=11 // pred_check
          %p192 = pneg %p67
        $region14: #{tpu_custom_call.1} parent=11 // pred_check_branch
          %194 = sbr.rel (%p192) target = $region16
        $region15: #{tpu_custom_call.1} parent=11 // pred_region
          %196 = vsyncadd [#allocation6], 0
          %s197 = sshll.u32 %s1, 4
          %s198 = int_to_ptr.hbm [resolvable:$true] %s197
          %s199 = sshll.u32 [#allocation5], 4
          %s200 = int_to_ptr.vmem [resolvable:$true] %s199
          %205 = dma.hbm_to_vmem [thread:$0]  %s198, 4096, %s200, [#allocation6], 128, 128, 8
        $region16: #{tpu_custom_call.1} parent=11 // pred_fallthru
          _
        // Predicated region
        $region17: #{tpu_custom_call.1} parent=11 // pred_check
          %p206 = pneg %p88
        $region18: #{tpu_custom_call.1} parent=11 // pred_check_branch
          %208 = sbr.rel (%p206) target = $region20
        $region19: #{tpu_custom_call.1} parent=11 // pred_region
          %210 = vsyncadd [#allocation6], 0
          %s212 = sshll.u32 %s2, 4
          %s213 = int_to_ptr.hbm [resolvable:$true] %s212
          %s214 = sshll.u32 [#allocation7], 4
          %s215 = int_to_ptr.vmem [resolvable:$true] %s214
          %217 = dma.hbm_to_vmem [thread:$0]  %s213, 32, %s215, [#allocation6]
        $region20: #{tpu_custom_call.1} parent=11 // pred_fallthru
          _
        // Predicated region
        $region21: #{tpu_custom_call.1} parent=11 // pred_check
          %p218 = pneg %p109
        $region22: #{tpu_custom_call.1} parent=11 // pred_check_branch
          %220 = sbr.rel (%p218) target = $region24
        $region23: #{tpu_custom_call.1} parent=11 // pred_region
          %222 = vsyncadd [#allocation9], 0
          %s223 = sshll.u32 %s3, 4
          %s224 = int_to_ptr.hbm [resolvable:$true] %s223
          %s225 = sshll.u32 [#allocation8], 4
          %s226 = int_to_ptr.vmem [resolvable:$true] %s225
          %231 = dma.hbm_to_vmem [thread:$0]  %s224, 512, %s226, [#allocation9], 256, 256, 16
        $region24: #{tpu_custom_call.1} parent=11 // pred_fallthru
          _
        // Predicated region
        $region25: #{tpu_custom_call.1} parent=11 // pred_check
          %p232 = pneg %p130
        $region26: #{tpu_custom_call.1} parent=11 // pred_check_branch
          %234 = sbr.rel (%p232) target = $region28
        $region27: #{tpu_custom_call.1} parent=11 // pred_region
          %236 = vsyncadd [#allocation9], 0
          %s237 = sshll.u32 %s4, 4
          %s238 = int_to_ptr.hbm [resolvable:$true] %s237
          %s239 = sshll.u32 [#allocation10], 4
          %s240 = int_to_ptr.vmem [resolvable:$true] %s239
          %245 = dma.hbm_to_vmem [thread:$0]  %s238, 2048, %s240, [#allocation9], 64, 64, 4
        $region28: #{tpu_custom_call.1} parent=11 // pred_fallthru
          _
        // Predicated region
        $region29: #{tpu_custom_call.1} parent=11 // pred_check
          %p246 = pneg %p151
        $region30: #{tpu_custom_call.1} parent=11 // pred_check_branch
          %248 = sbr.rel (%p246) target = $region32
        $region31: #{tpu_custom_call.1} parent=11 // pred_region
          _
        $region32: #{tpu_custom_call.1} parent=11 // pred_fallthru
          _
      $region12: #{tpu_custom_call.1} parent=5 // pred_fallthru
        _
      %p249 = scmp.lt.s32.totalorder %s20, 2
      // Predicated region
      $region33: #{tpu_custom_call.1} parent=5 // pred_check
        %p250 = pneg %p249
      $region34: #{tpu_custom_call.1} parent=5 // pred_check_branch
        %252 = sbr.rel (%p250) target = $region36
      $region35: #{tpu_custom_call.1} parent=5 // pred_region
        // Predicated region
        $region37: #{tpu_custom_call.1} parent=35 // pred_check
          %p253 = pneg %p40
        $region38: #{tpu_custom_call.1} parent=35 // pred_check_branch
          %255 = sbr.rel (%p253) target = $region40
        $region39: #{tpu_custom_call.1} parent=35 // pred_region
          %s256 = sand.u32 %s30, 1
          %s257 = scalar_lea.sflag [#allocation3], %s256
          %s258 = sand.u32 %s30, 1
          %s259 = smul.addr %s258, 64
          %s260 = scalar_lea.vmem [#allocation2], %s259
          %s261 = smul.u32 8, %s20
          %263 = vsyncadd %s257, 0
          %s264 = smul.addr %s261, 2
          %s265 = smul.addr %s264, 4
          %s266 = scalar_lea.hbm %s0, %s265
          %s267 = sshll.u32 %s266, 4
          %s268 = int_to_ptr.hbm [resolvable:$true] %s267
          %s269 = sshll.u32 %s260, 4
          %s270 = int_to_ptr.vmem [resolvable:$true] %s269
          %275 = dma.hbm_to_vmem [thread:$0]  %s268, 1024, %s270, %s257, 64, 64, 4
        $region40: #{tpu_custom_call.1} parent=35 // pred_fallthru
          _
      $region36: #{tpu_custom_call.1} parent=5 // pred_fallthru
        _
      %p276 = scmp.le.s32.totalorder 1, %s20
      %p277 = scmp.lt.s32.totalorder %s20, 3
      %p278 = pnand %p276, %p277
      %p279 = pneg %p278
      // Predicated region
      $region41: #{tpu_custom_call.1} parent=5 // pred_check
        _
      $region42: #{tpu_custom_call.1} parent=5 // pred_check_branch
        %281 = sbr.rel (%p278) target = $region44
      $region43: #{tpu_custom_call.1} parent=5 // pred_region
        %s282 = ssub.s32 %s20, 1
        %s283 = sand.u32 %s33, 1
        %s284 = scalar_lea.sflag [#allocation3], %s283
        %s285 = sand.u32 %s33, 1
        %s286 = smul.addr %s285, 64
        %s287 = scalar_lea.vmem [#allocation2], %s286
        // Predicated region
        $region45: #{tpu_custom_call.1} parent=43 // pred_check
          %p288 = pneg %p46
        $region46: #{tpu_custom_call.1} parent=43 // pred_check_branch
          %290 = sbr.rel (%p288) target = $region48
        $region47: #{tpu_custom_call.1} parent=43 // pred_region
          %292 = dma.done %s284, 1024
        $region48: #{tpu_custom_call.1} parent=43 // pred_fallthru
          _
        // Predicated region
        $region49: #{tpu_custom_call.1} parent=43 // pred_check
          %p293 = pneg %p67
        $region50: #{tpu_custom_call.1} parent=43 // pred_check_branch
          %295 = sbr.rel (%p293) target = $region52
        $region51: #{tpu_custom_call.1} parent=43 // pred_region
          %297 = dma.done [#allocation6], 4096
        $region52: #{tpu_custom_call.1} parent=43 // pred_fallthru
          _
        // Predicated region
        $region53: #{tpu_custom_call.1} parent=43 // pred_check
          %p298 = pneg %p88
        $region54: #{tpu_custom_call.1} parent=43 // pred_check_branch
          %300 = sbr.rel (%p298) target = $region56
        $region55: #{tpu_custom_call.1} parent=43 // pred_region
          %302 = dma.done [#allocation6], 32
        $region56: #{tpu_custom_call.1} parent=43 // pred_fallthru
          _
        // Predicated region
        $region57: #{tpu_custom_call.1} parent=43 // pred_check
          %p303 = pneg %p109
        $region58: #{tpu_custom_call.1} parent=43 // pred_check_branch
          %305 = sbr.rel (%p303) target = $region60
        $region59: #{tpu_custom_call.1} parent=43 // pred_region
          %307 = dma.done [#allocation9], 512
        $region60: #{tpu_custom_call.1} parent=43 // pred_fallthru
          _
        // Predicated region
        $region61: #{tpu_custom_call.1} parent=43 // pred_check
          %p308 = pneg %p130
        $region62: #{tpu_custom_call.1} parent=43 // pred_check_branch
          %310 = sbr.rel (%p308) target = $region64
        $region63: #{tpu_custom_call.1} parent=43 // pred_region
          %312 = dma.done [#allocation9], 2048
        $region64: #{tpu_custom_call.1} parent=43 // pred_fallthru
          _
        %s313 = sand.u32 %s33, 1
        %s314 = scalar_lea.sflag [#allocation3], %s313
        %s315 = sand.u32 %s33, 1
        %s316 = smul.addr %s315, 64
        %s317 = scalar_lea.vmem [#allocation2], %s316
        %p318 = pneg %p46
        %p319 = pneg %p43
        %p320 = pneg %p67
        %p321 = pneg %p64
        %p322 = pneg %p88
        %p323 = pneg %p85
        %p324 = pneg %p109
        %p325 = pneg %p106
        %p326 = pneg %p130
        %p327 = pneg %p127
        %p328 = pneg %p151
        %p329 = pneg %p148
        %p330 = pneg %p177
        %p331 = pneg %p174
        %s332 = sand.u32 %s164, 1
        %s333 = scalar_lea.sflag [#allocation4], %s332
        %s334 = sand.u32 %s164, 1
        %s335 = smul.addr %s334, 8
        %s336 = scalar_lea.vmem [#allocation11], %s335
        %s337 = smul.u32 8, %s25
        %v339 = vld [vmem:[%s287] sm:$0xf]
        %v340 = vld [vmem:[%s287 + $0x4] sm:$0xf]
        %v341 = vld [vmem:[%s287 + $0x8] sm:$0xf]
        %v342 = vld [vmem:[%s287 + $0xc] sm:$0xf]
        %v343 = vld [vmem:[%s287 + $0x10] sm:$0xf]
        %v344 = vld [vmem:[%s287 + $0x14] sm:$0xf]
        %v345 = vld [vmem:[%s287 + $0x18] sm:$0xf]
        %v346 = vld [vmem:[%s287 + $0x1c] sm:$0xf]
        %v347 = vld [vmem:[%s287 + $0x20] sm:$0xf]
        %v348 = vld [vmem:[%s287 + $0x24] sm:$0xf]
        %v349 = vld [vmem:[%s287 + $0x28] sm:$0xf]
        %v350 = vld [vmem:[%s287 + $0x2c] sm:$0xf]
        %v351 = vld [vmem:[%s287 + $0x30] sm:$0xf]
        %v352 = vld [vmem:[%s287 + $0x34] sm:$0xf]
        %v353 = vld [vmem:[%s287 + $0x38] sm:$0xf]
        %v354 = vld [vmem:[%s287 + $0x3c] sm:$0xf]
        %v355 = vunpack.c.l.bf16 %v339
        %v356 = vunpack.c.l.bf16 %v340
        %v357 = vunpack.c.l.bf16 %v341
        %v358 = vunpack.c.l.bf16 %v342
        %v359 = vunpack.c.l.bf16 %v343
        %v360 = vunpack.c.l.bf16 %v344
        %v361 = vunpack.c.l.bf16 %v345
        %v362 = vunpack.c.l.bf16 %v346
        %v363 = vunpack.c.l.bf16 %v347
        %v364 = vunpack.c.l.bf16 %v348
        %v365 = vunpack.c.l.bf16 %v349
        %v366 = vunpack.c.l.bf16 %v350
        %v367 = vunpack.c.l.bf16 %v351
        %v368 = vunpack.c.l.bf16 %v352
        %v369 = vunpack.c.l.bf16 %v353
        %v370 = vunpack.c.l.bf16 %v354
        %v371 = vrot.slane %v355, 1
        %v372 = vrot.slane %v356, 1
        %v373 = vrot.slane %v357, 1
        %v374 = vrot.slane %v358, 1
        %v375 = vrot.slane %v359, 1
        %v376 = vrot.slane %v360, 1
        %v377 = vrot.slane %v361, 1
        %v378 = vrot.slane %v362, 1
        %v379 = vrot.slane %v363, 1
        %v380 = vrot.slane %v364, 1
        %v381 = vrot.slane %v365, 1
        %v382 = vrot.slane %v366, 1
        %v383 = vrot.slane %v367, 1
        %v384 = vrot.slane %v368, 1
        %v385 = vrot.slane %v369, 1
        %v386 = vrot.slane %v370, 1
        %v387 = vlaneseq
        %v388 = vshrl.u32 %v387, 7
        %vm389 = vcmp.lt.s32.totalorder %v388, 7
        %v390 = vsel %vm389, %v385, %v386
        %v391 = vsel %vm389, %v384, %v385
        %v392 = vsel %vm389, %v383, %v384
        %v393 = vsel %vm389, %v382, %v383
        %v394 = vsel %vm389, %v381, %v382
        %v395 = vsel %vm389, %v380, %v381
        %v396 = vsel %vm389, %v379, %v380
        %v397 = vsel %vm389, %v378, %v379
        %v398 = vsel %vm389, %v377, %v378
        %v399 = vsel %vm389, %v376, %v377
        %v400 = vsel %vm389, %v375, %v376
        %v401 = vsel %vm389, %v374, %v375
        %v402 = vsel %vm389, %v373, %v374
        %v403 = vsel %vm389, %v372, %v373
        %v404 = vsel %vm389, %v371, %v372
        %v405 = vsel %vm389, %v386, %v371
        %v406 = vpack.c.bf16 %v404, %v404
        %v407 = vpack.c.bf16 %v403, %v403
        %v408 = vpack.c.bf16 %v402, %v402
        %v409 = vpack.c.bf16 %v401, %v401
        %v410 = vpack.c.bf16 %v400, %v400
        %v411 = vpack.c.bf16 %v399, %v399
        %v412 = vpack.c.bf16 %v398, %v398
        %v413 = vpack.c.bf16 %v397, %v397
        %v414 = vpack.c.bf16 %v396, %v396
        %v415 = vpack.c.bf16 %v395, %v395
        %v416 = vpack.c.bf16 %v394, %v394
        %v417 = vpack.c.bf16 %v393, %v393
        %v418 = vpack.c.bf16 %v392, %v392
        %v419 = vpack.c.bf16 %v391, %v391
        %v420 = vpack.c.bf16 %v390, %v390
        %v421 = vpack.c.bf16 %v405, %v405
        %v422 = vrot.slane %v355, 2
        %v423 = vrot.slane %v356, 2
        %v424 = vrot.slane %v357, 2
        %v425 = vrot.slane %v358, 2
        %v426 = vrot.slane %v359, 2
        %v427 = vrot.slane %v360, 2
        %v428 = vrot.slane %v361, 2
        %v429 = vrot.slane %v362, 2
        %v430 = vrot.slane %v363, 2
        %v431 = vrot.slane %v364, 2
        %v432 = vrot.slane %v365, 2
        %v433 = vrot.slane %v366, 2
        %v434 = vrot.slane %v367, 2
        %v435 = vrot.slane %v368, 2
        %v436 = vrot.slane %v369, 2
        %v437 = vrot.slane %v370, 2
        %vm438 = vcmp.lt.s32.totalorder %v388, 6
        %v439 = vsel %vm438, %v436, %v437
        %v440 = vsel %vm438, %v435, %v436
        %v441 = vsel %vm438, %v434, %v435
        %v442 = vsel %vm438, %v433, %v434
        %v443 = vsel %vm438, %v432, %v433
        %v444 = vsel %vm438, %v431, %v432
        %v445 = vsel %vm438, %v430, %v431
        %v446 = vsel %vm438, %v429, %v430
        %v447 = vsel %vm438, %v428, %v429
        %v448 = vsel %vm438, %v427, %v428
        %v449 = vsel %vm438, %v426, %v427
        %v450 = vsel %vm438, %v425, %v426
        %v451 = vsel %vm438, %v424, %v425
        %v452 = vsel %vm438, %v423, %v424
        %v453 = vsel %vm438, %v422, %v423
        %v454 = vsel %vm438, %v437, %v422
        %v455 = vpack.c.bf16 %v453, %v453
        %v456 = vpack.c.bf16 %v452, %v452
        %v457 = vpack.c.bf16 %v451, %v451
        %v458 = vpack.c.bf16 %v450, %v450
        %v459 = vpack.c.bf16 %v449, %v449
        %v460 = vpack.c.bf16 %v448, %v448
        %v461 = vpack.c.bf16 %v447, %v447
        %v462 = vpack.c.bf16 %v446, %v446
        %v463 = vpack.c.bf16 %v445, %v445
        %v464 = vpack.c.bf16 %v444, %v444
        %v465 = vpack.c.bf16 %v443, %v443
        %v466 = vpack.c.bf16 %v442, %v442
        %v467 = vpack.c.bf16 %v441, %v441
        %v468 = vpack.c.bf16 %v440, %v440
        %v469 = vpack.c.bf16 %v439, %v439
        %v470 = vpack.c.bf16 %v454, %v454
        %v471 = vrot.slane %v355, 3
        %v472 = vrot.slane %v356, 3
        %v473 = vrot.slane %v357, 3
        %v474 = vrot.slane %v358, 3
        %v475 = vrot.slane %v359, 3
        %v476 = vrot.slane %v360, 3
        %v477 = vrot.slane %v361, 3
        %v478 = vrot.slane %v362, 3
        %v479 = vrot.slane %v363, 3
        %v480 = vrot.slane %v364, 3
        %v481 = vrot.slane %v365, 3
        %v482 = vrot.slane %v366, 3
        %v483 = vrot.slane %v367, 3
        %v484 = vrot.slane %v368, 3
        %v485 = vrot.slane %v369, 3
        %v486 = vrot.slane %v370, 3
        %vm487 = vcmp.lt.s32.totalorder %v388, 5
        %v488 = vsel %vm487, %v485, %v486
        %v489 = vsel %vm487, %v484, %v485
        %v490 = vsel %vm487, %v483, %v484
        %v491 = vsel %vm487, %v482, %v483
        %v492 = vsel %vm487, %v481, %v482
        %v493 = vsel %vm487, %v480, %v481
        %v494 = vsel %vm487, %v479, %v480
        %v495 = vsel %vm487, %v478, %v479
        %v496 = vsel %vm487, %v477, %v478
        %v497 = vsel %vm487, %v476, %v477
        %v498 = vsel %vm487, %v475, %v476
        %v499 = vsel %vm487, %v474, %v475
        %v500 = vsel %vm487, %v473, %v474
        %v501 = vsel %vm487, %v472, %v473
        %v502 = vsel %vm487, %v471, %v472
        %v503 = vsel %vm487, %v486, %v471
        %v504 = vpack.c.bf16 %v502, %v502
        %v505 = vpack.c.bf16 %v501, %v501
        %v506 = vpack.c.bf16 %v500, %v500
        %v507 = vpack.c.bf16 %v499, %v499
        %v508 = vpack.c.bf16 %v498, %v498
        %v509 = vpack.c.bf16 %v497, %v497
        %v510 = vpack.c.bf16 %v496, %v496
        %v511 = vpack.c.bf16 %v495, %v495
        %v512 = vpack.c.bf16 %v494, %v494
        %v513 = vpack.c.bf16 %v493, %v493
        %v514 = vpack.c.bf16 %v492, %v492
        %v515 = vpack.c.bf16 %v491, %v491
        %v516 = vpack.c.bf16 %v490, %v490
        %v517 = vpack.c.bf16 %v489, %v489
        %v518 = vpack.c.bf16 %v488, %v488
        %v519 = vpack.c.bf16 %v503, %v503
        %v520 = vrot.slane %v355, 4
        %v521 = vrot.slane %v356, 4
        %v522 = vrot.slane %v357, 4
        %v523 = vrot.slane %v358, 4
        %v524 = vrot.slane %v359, 4
        %v525 = vrot.slane %v360, 4
        %v526 = vrot.slane %v361, 4
        %v527 = vrot.slane %v362, 4
        %v528 = vrot.slane %v363, 4
        %v529 = vrot.slane %v364, 4
        %v530 = vrot.slane %v365, 4
        %v531 = vrot.slane %v366, 4
        %v532 = vrot.slane %v367, 4
        %v533 = vrot.slane %v368, 4
        %v534 = vrot.slane %v369, 4
        %v535 = vrot.slane %v370, 4
        %vm536 = vcmp.lt.s32.totalorder %v388, 4
        %v537 = vsel %vm536, %v534, %v535
        %v538 = vsel %vm536, %v533, %v534
        %v539 = vsel %vm536, %v532, %v533
        %v540 = vsel %vm536, %v531, %v532
        %v541 = vsel %vm536, %v530, %v531
        %v542 = vsel %vm536, %v529, %v530
        %v543 = vsel %vm536, %v528, %v529
        %v544 = vsel %vm536, %v527, %v528
        %v545 = vsel %vm536, %v526, %v527
        %v546 = vsel %vm536, %v525, %v526
        %v547 = vsel %vm536, %v524, %v525
        %v548 = vsel %vm536, %v523, %v524
        %v549 = vsel %vm536, %v522, %v523
        %v550 = vsel %vm536, %v521, %v522
        %v551 = vsel %vm536, %v520, %v521
        %v552 = vsel %vm536, %v535, %v520
        %v553 = vpack.c.bf16 %v551, %v551
        %v554 = vpack.c.bf16 %v550, %v550
        %v555 = vpack.c.bf16 %v549, %v549
        %v556 = vpack.c.bf16 %v548, %v548
        %v557 = vpack.c.bf16 %v547, %v547
        %v558 = vpack.c.bf16 %v546, %v546
        %v559 = vpack.c.bf16 %v545, %v545
        %v560 = vpack.c.bf16 %v544, %v544
        %v561 = vpack.c.bf16 %v543, %v543
        %v562 = vpack.c.bf16 %v542, %v542
        %v563 = vpack.c.bf16 %v541, %v541
        %v564 = vpack.c.bf16 %v540, %v540
        %v565 = vpack.c.bf16 %v539, %v539
        %v566 = vpack.c.bf16 %v538, %v538
        %v567 = vpack.c.bf16 %v537, %v537
        %v568 = vpack.c.bf16 %v552, %v552
        %v585 = vunpack.c.l.b16 %v339
        %v586 = vunpack.c.l.b16 %v340
        %v587 = vunpack.c.l.b16 %v341
        %v588 = vunpack.c.l.b16 %v342
        %v589 = vunpack.c.l.b16 %v343
        %v590 = vunpack.c.l.b16 %v344
        %v591 = vunpack.c.l.b16 %v345
        %v592 = vunpack.c.l.b16 %v346
        %v593 = vunpack.c.l.b16 %v347
        %v594 = vunpack.c.l.b16 %v348
        %v595 = vunpack.c.l.b16 %v349
        %v596 = vunpack.c.l.b16 %v350
        %v597 = vunpack.c.l.b16 %v351
        %v598 = vunpack.c.l.b16 %v352
        %v599 = vunpack.c.l.b16 %v353
        %v600 = vunpack.c.l.b16 %v354
        %v601 = vpack.c.b16 %v586, %v585
        %v602 = vpack.c.b16 %v588, %v587
        %v603 = vpack.c.b16 %v590, %v589
        %v604 = vpack.c.b16 %v592, %v591
        %v605 = vpack.c.b16 %v594, %v593
        %v606 = vpack.c.b16 %v596, %v595
        %v607 = vpack.c.b16 %v598, %v597
        %v608 = vpack.c.b16 %v600, %v599
        %v625 = vunpack.c.l.b16 %v406
        %v626 = vunpack.c.l.b16 %v407
        %v627 = vunpack.c.l.b16 %v408
        %v628 = vunpack.c.l.b16 %v409
        %v629 = vunpack.c.l.b16 %v410
        %v630 = vunpack.c.l.b16 %v411
        %v631 = vunpack.c.l.b16 %v412
        %v632 = vunpack.c.l.b16 %v413
        %v633 = vunpack.c.l.b16 %v414
        %v634 = vunpack.c.l.b16 %v415
        %v635 = vunpack.c.l.b16 %v416
        %v636 = vunpack.c.l.b16 %v417
        %v637 = vunpack.c.l.b16 %v418
        %v638 = vunpack.c.l.b16 %v419
        %v639 = vunpack.c.l.b16 %v420
        %v640 = vunpack.c.l.b16 %v421
        %v641 = vpack.c.b16 %v626, %v625
        %v642 = vpack.c.b16 %v628, %v627
        %v643 = vpack.c.b16 %v630, %v629
        %v644 = vpack.c.b16 %v632, %v631
        %v645 = vpack.c.b16 %v634, %v633
        %v646 = vpack.c.b16 %v636, %v635
        %v647 = vpack.c.b16 %v638, %v637
        %v648 = vpack.c.b16 %v640, %v639
        %649 = vrot.lane.b32.xlu0 %v641, 32
        %v650 = vpop.permute.xlu0 %649
        %651 = vrot.lane.b32.xlu0 %v642, 32
        %v652 = vpop.permute.xlu0 %651
        %653 = vrot.lane.b32.xlu0 %v643, 32
        %v654 = vpop.permute.xlu0 %653
        %655 = vrot.lane.b32.xlu0 %v644, 32
        %v656 = vpop.permute.xlu0 %655
        %657 = vrot.lane.b32.xlu0 %v645, 32
        %v658 = vpop.permute.xlu0 %657
        %659 = vrot.lane.b32.xlu0 %v646, 32
        %v660 = vpop.permute.xlu0 %659
        %661 = vrot.lane.b32.xlu0 %v647, 32
        %v662 = vpop.permute.xlu0 %661
        %663 = vrot.lane.b32.xlu0 %v648, 32
        %v664 = vpop.permute.xlu0 %663
        %v681 = vunpack.c.l.b16 %v455
        %v682 = vunpack.c.l.b16 %v456
        %v683 = vunpack.c.l.b16 %v457
        %v684 = vunpack.c.l.b16 %v458
        %v685 = vunpack.c.l.b16 %v459
        %v686 = vunpack.c.l.b16 %v460
        %v687 = vunpack.c.l.b16 %v461
        %v688 = vunpack.c.l.b16 %v462
        %v689 = vunpack.c.l.b16 %v463
        %v690 = vunpack.c.l.b16 %v464
        %v691 = vunpack.c.l.b16 %v465
        %v692 = vunpack.c.l.b16 %v466
        %v693 = vunpack.c.l.b16 %v467
        %v694 = vunpack.c.l.b16 %v468
        %v695 = vunpack.c.l.b16 %v469
        %v696 = vunpack.c.l.b16 %v470
        %v697 = vpack.c.b16 %v682, %v681
        %v698 = vpack.c.b16 %v684, %v683
        %v699 = vpack.c.b16 %v686, %v685
        %v700 = vpack.c.b16 %v688, %v687
        %v701 = vpack.c.b16 %v690, %v689
        %v702 = vpack.c.b16 %v692, %v691
        %v703 = vpack.c.b16 %v694, %v693
        %v704 = vpack.c.b16 %v696, %v695
        %705 = vrot.lane.b32.xlu0 %v697, 64
        %v706 = vpop.permute.xlu0 %705
        %707 = vrot.lane.b32.xlu0 %v698, 64
        %v708 = vpop.permute.xlu0 %707
        %709 = vrot.lane.b32.xlu0 %v699, 64
        %v710 = vpop.permute.xlu0 %709
        %711 = vrot.lane.b32.xlu0 %v700, 64
        %v712 = vpop.permute.xlu0 %711
        %713 = vrot.lane.b32.xlu0 %v701, 64
        %v714 = vpop.permute.xlu0 %713
        %715 = vrot.lane.b32.xlu0 %v702, 64
        %v716 = vpop.permute.xlu0 %715
        %717 = vrot.lane.b32.xlu0 %v703, 64
        %v718 = vpop.permute.xlu0 %717
        %719 = vrot.lane.b32.xlu0 %v704, 64
        %v720 = vpop.permute.xlu0 %719
        %v737 = vunpack.c.l.b16 %v504
        %v738 = vunpack.c.l.b16 %v505
        %v739 = vunpack.c.l.b16 %v506
        %v740 = vunpack.c.l.b16 %v507
        %v741 = vunpack.c.l.b16 %v508
        %v742 = vunpack.c.l.b16 %v509
        %v743 = vunpack.c.l.b16 %v510
        %v744 = vunpack.c.l.b16 %v511
        %v745 = vunpack.c.l.b16 %v512
        %v746 = vunpack.c.l.b16 %v513
        %v747 = vunpack.c.l.b16 %v514
        %v748 = vunpack.c.l.b16 %v515
        %v749 = vunpack.c.l.b16 %v516
        %v750 = vunpack.c.l.b16 %v517
        %v751 = vunpack.c.l.b16 %v518
        %v752 = vunpack.c.l.b16 %v519
        %v753 = vpack.c.b16 %v738, %v737
        %v754 = vpack.c.b16 %v740, %v739
        %v755 = vpack.c.b16 %v742, %v741
        %v756 = vpack.c.b16 %v744, %v743
        %v757 = vpack.c.b16 %v746, %v745
        %v758 = vpack.c.b16 %v748, %v747
        %v759 = vpack.c.b16 %v750, %v749
        %v760 = vpack.c.b16 %v752, %v751
        %761 = vrot.lane.b32.xlu0 %v753, 96
        %v762 = vpop.permute.xlu0 %761
        %763 = vrot.lane.b32.xlu0 %v754, 96
        %v764 = vpop.permute.xlu0 %763
        %765 = vrot.lane.b32.xlu0 %v755, 96
        %v766 = vpop.permute.xlu0 %765
        %767 = vrot.lane.b32.xlu0 %v756, 96
        %v768 = vpop.permute.xlu0 %767
        %769 = vrot.lane.b32.xlu0 %v757, 96
        %v770 = vpop.permute.xlu0 %769
        %771 = vrot.lane.b32.xlu0 %v758, 96
        %v772 = vpop.permute.xlu0 %771
        %773 = vrot.lane.b32.xlu0 %v759, 96
        %v774 = vpop.permute.xlu0 %773
        %775 = vrot.lane.b32.xlu0 %v760, 96
        %v776 = vpop.permute.xlu0 %775
        %v793 = vunpack.c.l.b16 %v553
        %v794 = vunpack.c.l.b16 %v554
        %v795 = vunpack.c.l.b16 %v555
        %v796 = vunpack.c.l.b16 %v556
        %v797 = vunpack.c.l.b16 %v557
        %v798 = vunpack.c.l.b16 %v558
        %v799 = vunpack.c.l.b16 %v559
        %v800 = vunpack.c.l.b16 %v560
        %v801 = vunpack.c.l.b16 %v561
        %v802 = vunpack.c.l.b16 %v562
        %v803 = vunpack.c.l.b16 %v563
        %v804 = vunpack.c.l.b16 %v564
        %v805 = vunpack.c.l.b16 %v565
        %v806 = vunpack.c.l.b16 %v566
        %v807 = vunpack.c.l.b16 %v567
        %v808 = vunpack.c.l.b16 %v568
        %v809 = vpack.c.b16 %v794, %v793
        %v810 = vpack.c.b16 %v796, %v795
        %v811 = vpack.c.b16 %v798, %v797
        %v812 = vpack.c.b16 %v800, %v799
        %v813 = vpack.c.b16 %v802, %v801
        %v814 = vpack.c.b16 %v804, %v803
        %v815 = vpack.c.b16 %v806, %v805
        %v816 = vpack.c.b16 %v808, %v807
        %vm817 = vcmask 261120
        %v820 = vsel %vm817, %v601, %v650
        %v823 = vsel %vm817, %v602, %v652
        %v826 = vsel %vm817, %v603, %v654
        %v829 = vsel %vm817, %v604, %v656
        %v832 = vsel %vm817, %v605, %v658
        %v835 = vsel %vm817, %v606, %v660
        %v838 = vsel %vm817, %v607, %v662
        %v841 = vsel %vm817, %v608, %v664
        %vm842 = vcmask 523264
        %v844 = vsel %vm842, %v820, %v706
        %v846 = vsel %vm842, %v823, %v708
        %v848 = vsel %vm842, %v826, %v710
        %v850 = vsel %vm842, %v829, %v712
        %v852 = vsel %vm842, %v832, %v714
        %v854 = vsel %vm842, %v835, %v716
        %v856 = vsel %vm842, %v838, %v718
        %v858 = vsel %vm842, %v841, %v720
        %vm859 = vcmask 785408
        %v861 = vsel %vm859, %v844, %v762
        %v864 = vsel %vm859, %v846, %v764
        %v867 = vsel %vm859, %v848, %v766
        %v870 = vsel %vm859, %v850, %v768
        %v873 = vsel %vm859, %v852, %v770
        %v876 = vsel %vm859, %v854, %v772
        %v879 = vsel %vm859, %v856, %v774
        %v882 = vsel %vm859, %v858, %v776
        %v886 = vsel %vm817, %v809, 0
        %v889 = vsel %vm817, %v810, 0
        %v892 = vsel %vm817, %v811, 0
        %v895 = vsel %vm817, %v812, 0
        %v898 = vsel %vm817, %v813, 0
        %v901 = vsel %vm817, %v814, 0
        %v904 = vsel %vm817, %v815, 0
        %v907 = vsel %vm817, %v816, 0
        %v909 = vld [vmem:[#allocation5] sm:$0xff]
        %v910 = vld [vmem:[#allocation5 + $0x8] sm:$0xff]
        %v911 = vld [vmem:[#allocation5 + $0x10] sm:$0xff]
        %v912 = vld [vmem:[#allocation5 + $0x18] sm:$0xff]
        %v913 = vld [vmem:[#allocation5 + $0x20] sm:$0xff]
        %v914 = vld [vmem:[#allocation5 + $0x28] sm:$0xff]
        %v915 = vld [vmem:[#allocation5 + $0x30] sm:$0xff]
        %v916 = vld [vmem:[#allocation5 + $0x38] sm:$0xff]
        %v917 = vld [vmem:[#allocation5 + $0x40] sm:$0xff]
        %v918 = vld [vmem:[#allocation5 + $0x48] sm:$0xff]
        %v919 = vld [vmem:[#allocation5 + $0x50] sm:$0xff]
        %v920 = vld [vmem:[#allocation5 + $0x58] sm:$0xff]
        %v921 = vld [vmem:[#allocation5 + $0x60] sm:$0xff]
        %v922 = vld [vmem:[#allocation5 + $0x68] sm:$0xff]
        %v923 = vld [vmem:[#allocation5 + $0x70] sm:$0xff]
        %v924 = vld [vmem:[#allocation5 + $0x78] sm:$0xff]
        %v925 = vld [vmem:[#allocation5 + $0x80] sm:$0xff]
        %v926 = vld [vmem:[#allocation5 + $0x88] sm:$0xff]
        %v927 = vld [vmem:[#allocation5 + $0x90] sm:$0xff]
        %v928 = vld [vmem:[#allocation5 + $0x98] sm:$0xff]
        %v929 = vld [vmem:[#allocation5 + $0xa0] sm:$0xff]
        %v930 = vld [vmem:[#allocation5 + $0xa8] sm:$0xff]
        %v931 = vld [vmem:[#allocation5 + $0xb0] sm:$0xff]
        %v932 = vld [vmem:[#allocation5 + $0xb8] sm:$0xff]
        %v933 = vld [vmem:[#allocation5 + $0xc0] sm:$0xff]
        %v934 = vld [vmem:[#allocation5 + $0xc8] sm:$0xff]
        %v935 = vld [vmem:[#allocation5 + $0xd0] sm:$0xff]
        %v936 = vld [vmem:[#allocation5 + $0xd8] sm:$0xff]
        %v937 = vld [vmem:[#allocation5 + $0xe0] sm:$0xff]
        %v938 = vld [vmem:[#allocation5 + $0xe8] sm:$0xff]
        %v939 = vld [vmem:[#allocation5 + $0xf0] sm:$0xff]
        %v940 = vld [vmem:[#allocation5 + $0xf8] sm:$0xff]
        %v941 = vld [vmem:[#allocation7] sm:$0x3]
        %v943 = vperm.slane %v941, 0
        %v944 = vperm.slane %v941, 1
        %v979 = vunpack.c.l.b16 %v909
        %v980 = vunpack.c.h.b16 %v909
        %v981 = vunpack.c.l.b16 %v910
        %v982 = vunpack.c.h.b16 %v910
        %v983 = vunpack.c.l.b16 %v911
        %v984 = vunpack.c.h.b16 %v911
        %v985 = vunpack.c.l.b16 %v912
        %v986 = vunpack.c.h.b16 %v912
        %v987 = vunpack.c.l.b16 %v913
        %v988 = vunpack.c.h.b16 %v913
        %v989 = vunpack.c.l.b16 %v914
        %v990 = vunpack.c.h.b16 %v914
        %v991 = vunpack.c.l.b16 %v915
        %v992 = vunpack.c.h.b16 %v915
        %v993 = vunpack.c.l.b16 %v916
        %v994 = vunpack.c.h.b16 %v916
        %v995 = vunpack.c.l.b16 %v917
        %v996 = vunpack.c.h.b16 %v917
        %v997 = vunpack.c.l.b16 %v918
        %v998 = vunpack.c.h.b16 %v918
        %v999 = vunpack.c.l.b16 %v919
        %v1000 = vunpack.c.h.b16 %v919
        %v1001 = vunpack.c.l.b16 %v920
        %v1002 = vunpack.c.h.b16 %v920
        %v1003 = vunpack.c.l.b16 %v921
        %v1004 = vunpack.c.h.b16 %v921
        %v1005 = vunpack.c.l.b16 %v922
        %v1006 = vunpack.c.h.b16 %v922
        %v1007 = vunpack.c.l.b16 %v923
        %v1008 = vunpack.c.h.b16 %v923
        %v1009 = vunpack.c.l.b16 %v924
        %v1010 = vunpack.c.h.b16 %v924
        %v1011 = vunpack.c.l.b16 %v925
        %v1012 = vunpack.c.h.b16 %v925
        %v1013 = vunpack.c.l.b16 %v926
        %v1014 = vunpack.c.h.b16 %v926
        %v1015 = vunpack.c.l.b16 %v927
        %v1016 = vunpack.c.h.b16 %v927
        %v1017 = vunpack.c.l.b16 %v928
        %v1018 = vunpack.c.h.b16 %v928
        %v1019 = vunpack.c.l.b16 %v929
        %v1020 = vunpack.c.h.b16 %v929
        %v1021 = vunpack.c.l.b16 %v930
        %v1022 = vunpack.c.h.b16 %v930
        %v1023 = vunpack.c.l.b16 %v931
        %v1024 = vunpack.c.h.b16 %v931
        %v1025 = vunpack.c.l.b16 %v932
        %v1026 = vunpack.c.h.b16 %v932
        %v1027 = vunpack.c.l.b16 %v933
        %v1028 = vunpack.c.h.b16 %v933
        %v1029 = vunpack.c.l.b16 %v934
        %v1030 = vunpack.c.h.b16 %v934
        %v1031 = vunpack.c.l.b16 %v935
        %v1032 = vunpack.c.h.b16 %v935
        %v1033 = vunpack.c.l.b16 %v936
        %v1034 = vunpack.c.h.b16 %v936
        %v1035 = vunpack.c.l.b16 %v937
        %v1036 = vunpack.c.h.b16 %v937
        %v1037 = vunpack.c.l.b16 %v938
        %v1038 = vunpack.c.h.b16 %v938
        %v1039 = vunpack.c.l.b16 %v939
        %v1040 = vunpack.c.h.b16 %v939
        %v1041 = vunpack.c.l.b16 %v940
        %v1042 = vunpack.c.h.b16 %v940
        %v1043 = vpack.c.b16 %v981, %v979
        %v1044 = vpack.c.b16 %v982, %v980
        %v1045 = vpack.c.b16 %v985, %v983
        %v1046 = vpack.c.b16 %v986, %v984
        %v1047 = vpack.c.b16 %v989, %v987
        %v1048 = vpack.c.b16 %v990, %v988
        %v1049 = vpack.c.b16 %v993, %v991
        %v1050 = vpack.c.b16 %v994, %v992
        %v1051 = vpack.c.b16 %v997, %v995
        %v1052 = vpack.c.b16 %v998, %v996
        %v1053 = vpack.c.b16 %v1001, %v999
        %v1054 = vpack.c.b16 %v1002, %v1000
        %v1055 = vpack.c.b16 %v1005, %v1003
        %v1056 = vpack.c.b16 %v1006, %v1004
        %v1057 = vpack.c.b16 %v1009, %v1007
        %v1058 = vpack.c.b16 %v1010, %v1008
        %v1059 = vpack.c.b16 %v1013, %v1011
        %v1060 = vpack.c.b16 %v1014, %v1012
        %v1061 = vpack.c.b16 %v1017, %v1015
        %v1062 = vpack.c.b16 %v1018, %v1016
        %v1063 = vpack.c.b16 %v1021, %v1019
        %v1064 = vpack.c.b16 %v1022, %v1020
        %v1065 = vpack.c.b16 %v1025, %v1023
        %v1066 = vpack.c.b16 %v1026, %v1024
        %v1067 = vpack.c.b16 %v1029, %v1027
        %v1068 = vpack.c.b16 %v1030, %v1028
        %v1069 = vpack.c.b16 %v1033, %v1031
        %v1070 = vpack.c.b16 %v1034, %v1032
        %v1071 = vpack.c.b16 %v1037, %v1035
        %v1072 = vpack.c.b16 %v1038, %v1036
        %v1073 = vpack.c.b16 %v1041, %v1039
        %v1074 = vpack.c.b16 %v1042, %v1040
        %1107 = vmatpush.bf16.msra.mxu0 %v1057
        %1108 = vmatpush.bf16.msra.mxu0 %v1055
        %1109 = vmatpush.bf16.msra.mxu0 %v1053
        %1110 = vmatpush.bf16.msra.mxu0 %v1051
        %1111 = vmatpush.bf16.msra.mxu0 %v1049
        %1112 = vmatpush.bf16.msra.mxu0 %v1047
        %1113 = vmatpush.bf16.msra.mxu0 %v1045
        %1114 = vmatpush.bf16.msra.mxu0 %v1043
        %1115 = vmatmul.bf16.gmra.mxu0 %v861
        %v1116 = vpop.f32.mrf.mxu0
        %v1117 = vadd.f32 %v943, %v1116
        %v1118 = vpop.f32.mrf.mxu0
        %v1119 = vadd.f32 %v943, %v1118
        %1120 = vmatmul.bf16.gmra.mxu0 %v864
        %v1121 = vpop.f32.mrf.mxu0
        %v1122 = vadd.f32 %v943, %v1121
        %v1123 = vpop.f32.mrf.mxu0
        %v1124 = vadd.f32 %v943, %v1123
        %1125 = vmatmul.bf16.gmra.mxu0 %v867
        %v1126 = vpop.f32.mrf.mxu0
        %v1127 = vadd.f32 %v943, %v1126
        %v1128 = vpop.f32.mrf.mxu0
        %v1129 = vadd.f32 %v943, %v1128
        %1130 = vmatmul.bf16.gmra.mxu0 %v870
        %v1131 = vpop.f32.mrf.mxu0
        %v1132 = vadd.f32 %v943, %v1131
        %v1133 = vpop.f32.mrf.mxu0
        %v1134 = vadd.f32 %v943, %v1133
        %1135 = vmatmul.bf16.gmra.mxu0 %v873
        %v1136 = vpop.f32.mrf.mxu0
        %v1137 = vadd.f32 %v943, %v1136
        %v1138 = vpop.f32.mrf.mxu0
        %v1139 = vadd.f32 %v943, %v1138
        %1140 = vmatmul.bf16.gmra.mxu0 %v876
        %v1141 = vpop.f32.mrf.mxu0
        %v1142 = vadd.f32 %v943, %v1141
        %v1143 = vpop.f32.mrf.mxu0
        %v1144 = vadd.f32 %v943, %v1143
        %1145 = vmatmul.bf16.gmra.mxu0 %v879
        %v1146 = vpop.f32.mrf.mxu0
        %v1147 = vadd.f32 %v943, %v1146
        %v1148 = vpop.f32.mrf.mxu0
        %v1149 = vadd.f32 %v943, %v1148
        %1150 = vmatmul.bf16.gmra.mxu0 %v882
        %v1151 = vpop.f32.mrf.mxu0
        %v1152 = vadd.f32 %v943, %v1151
        %v1153 = vpop.f32.mrf.mxu0
        %v1154 = vadd.f32 %v943, %v1153
        %1155 = vdwg.mxu0
        %1156 = vmatpush.bf16.msra.mxu0 %v1073
        %1157 = vmatpush.bf16.msra.mxu0 %v1071
        %1158 = vmatpush.bf16.msra.mxu0 %v1069
        %1159 = vmatpush.bf16.msra.mxu0 %v1067
        %1160 = vmatpush.bf16.msra.mxu0 %v1065
        %1161 = vmatpush.bf16.msra.mxu0 %v1063
        %1162 = vmatpush.bf16.msra.mxu0 %v1061
        %1163 = vmatpush.bf16.msra.mxu0 %v1059
        %1164 = vmatmul.bf16.gmra.mxu0 %v886
        %v1165 = vpop.f32.mrf.mxu0
        %v1166 = vadd.f32 %v1117, %v1165
        %v1167 = vpop.f32.mrf.mxu0
        %v1168 = vadd.f32 %v1119, %v1167
        %1169 = vmatmul.bf16.gmra.mxu0 %v889
        %v1170 = vpop.f32.mrf.mxu0
        %v1171 = vadd.f32 %v1122, %v1170
        %v1172 = vpop.f32.mrf.mxu0
        %v1173 = vadd.f32 %v1124, %v1172
        %1174 = vmatmul.bf16.gmra.mxu0 %v892
        %v1175 = vpop.f32.mrf.mxu0
        %v1176 = vadd.f32 %v1127, %v1175
        %v1177 = vpop.f32.mrf.mxu0
        %v1178 = vadd.f32 %v1129, %v1177
        %1179 = vmatmul.bf16.gmra.mxu0 %v895
        %v1180 = vpop.f32.mrf.mxu0
        %v1181 = vadd.f32 %v1132, %v1180
        %v1182 = vpop.f32.mrf.mxu0
        %v1183 = vadd.f32 %v1134, %v1182
        %1184 = vmatmul.bf16.gmra.mxu0 %v898
        %v1185 = vpop.f32.mrf.mxu0
        %v1186 = vadd.f32 %v1137, %v1185
        %v1187 = vpop.f32.mrf.mxu0
        %v1188 = vadd.f32 %v1139, %v1187
        %1189 = vmatmul.bf16.gmra.mxu0 %v901
        %v1190 = vpop.f32.mrf.mxu0
        %v1191 = vadd.f32 %v1142, %v1190
        %v1192 = vpop.f32.mrf.mxu0
        %v1193 = vadd.f32 %v1144, %v1192
        %1194 = vmatmul.bf16.gmra.mxu0 %v904
        %v1195 = vpop.f32.mrf.mxu0
        %v1196 = vadd.f32 %v1147, %v1195
        %v1197 = vpop.f32.mrf.mxu0
        %v1198 = vadd.f32 %v1149, %v1197
        %1199 = vmatmul.bf16.gmra.mxu0 %v907
        %v1200 = vpop.f32.mrf.mxu0
        %v1201 = vadd.f32 %v1152, %v1200
        %v1202 = vpop.f32.mrf.mxu0
        %v1203 = vadd.f32 %v1154, %v1202
        %1204 = vdwg.mxu0
        %1205 = vmatpush.bf16.msra.mxu0 %v1058
        %1206 = vmatpush.bf16.msra.mxu0 %v1056
        %1207 = vmatpush.bf16.msra.mxu0 %v1054
        %1208 = vmatpush.bf16.msra.mxu0 %v1052
        %1209 = vmatpush.bf16.msra.mxu0 %v1050
        %1210 = vmatpush.bf16.msra.mxu0 %v1048
        %1211 = vmatpush.bf16.msra.mxu0 %v1046
        %1212 = vmatpush.bf16.msra.mxu0 %v1044
        %1213 = vmatmul.bf16.gmra.mxu0 %v861
        %v1214 = vpop.f32.mrf.mxu0
        %v1215 = vadd.f32 %v944, %v1214
        %v1216 = vpop.f32.mrf.mxu0
        %v1217 = vadd.f32 %v944, %v1216
        %1218 = vmatmul.bf16.gmra.mxu0 %v864
        %v1219 = vpop.f32.mrf.mxu0
        %v1220 = vadd.f32 %v944, %v1219
        %v1221 = vpop.f32.mrf.mxu0
        %v1222 = vadd.f32 %v944, %v1221
        %1223 = vmatmul.bf16.gmra.mxu0 %v867
        %v1224 = vpop.f32.mrf.mxu0
        %v1225 = vadd.f32 %v944, %v1224
        %v1226 = vpop.f32.mrf.mxu0
        %v1227 = vadd.f32 %v944, %v1226
        %1228 = vmatmul.bf16.gmra.mxu0 %v870
        %v1229 = vpop.f32.mrf.mxu0
        %v1230 = vadd.f32 %v944, %v1229
        %v1231 = vpop.f32.mrf.mxu0
        %v1232 = vadd.f32 %v944, %v1231
        %1233 = vmatmul.bf16.gmra.mxu0 %v873
        %v1234 = vpop.f32.mrf.mxu0
        %v1235 = vadd.f32 %v944, %v1234
        %v1236 = vpop.f32.mrf.mxu0
        %v1237 = vadd.f32 %v944, %v1236
        %1238 = vmatmul.bf16.gmra.mxu0 %v876
        %v1239 = vpop.f32.mrf.mxu0
        %v1240 = vadd.f32 %v944, %v1239
        %v1241 = vpop.f32.mrf.mxu0
        %v1242 = vadd.f32 %v944, %v1241
        %1243 = vmatmul.bf16.gmra.mxu0 %v879
        %v1244 = vpop.f32.mrf.mxu0
        %v1245 = vadd.f32 %v944, %v1244
        %v1246 = vpop.f32.mrf.mxu0
        %v1247 = vadd.f32 %v944, %v1246
        %1248 = vmatmul.bf16.gmra.mxu0 %v882
        %v1249 = vpop.f32.mrf.mxu0
        %v1250 = vadd.f32 %v944, %v1249
        %v1251 = vpop.f32.mrf.mxu0
        %v1252 = vadd.f32 %v944, %v1251
        %1253 = vdwg.mxu0
        %1254 = vmatpush.bf16.msra.mxu0 %v1074
        %1255 = vmatpush.bf16.msra.mxu0 %v1072
        %1256 = vmatpush.bf16.msra.mxu0 %v1070
        %1257 = vmatpush.bf16.msra.mxu0 %v1068
        %1258 = vmatpush.bf16.msra.mxu0 %v1066
        %1259 = vmatpush.bf16.msra.mxu0 %v1064
        %1260 = vmatpush.bf16.msra.mxu0 %v1062
        %1261 = vmatpush.bf16.msra.mxu0 %v1060
        %1262 = vmatmul.bf16.gmra.mxu0 %v886
        %v1263 = vpop.f32.mrf.mxu0
        %v1264 = vadd.f32 %v1215, %v1263
        %v1265 = vpop.f32.mrf.mxu0
        %v1266 = vadd.f32 %v1217, %v1265
        %1267 = vmatmul.bf16.gmra.mxu0 %v889
        %v1268 = vpop.f32.mrf.mxu0
        %v1269 = vadd.f32 %v1220, %v1268
        %v1270 = vpop.f32.mrf.mxu0
        %v1271 = vadd.f32 %v1222, %v1270
        %1272 = vmatmul.bf16.gmra.mxu0 %v892
        %v1273 = vpop.f32.mrf.mxu0
        %v1274 = vadd.f32 %v1225, %v1273
        %v1275 = vpop.f32.mrf.mxu0
        %v1276 = vadd.f32 %v1227, %v1275
        %1277 = vmatmul.bf16.gmra.mxu0 %v895
        %v1278 = vpop.f32.mrf.mxu0
        %v1279 = vadd.f32 %v1230, %v1278
        %v1280 = vpop.f32.mrf.mxu0
        %v1281 = vadd.f32 %v1232, %v1280
        %1282 = vmatmul.bf16.gmra.mxu0 %v898
        %v1283 = vpop.f32.mrf.mxu0
        %v1284 = vadd.f32 %v1235, %v1283
        %v1285 = vpop.f32.mrf.mxu0
        %v1286 = vadd.f32 %v1237, %v1285
        %1287 = vmatmul.bf16.gmra.mxu0 %v901
        %v1288 = vpop.f32.mrf.mxu0
        %v1289 = vadd.f32 %v1240, %v1288
        %v1290 = vpop.f32.mrf.mxu0
        %v1291 = vadd.f32 %v1242, %v1290
        %1292 = vmatmul.bf16.gmra.mxu0 %v904
        %v1293 = vpop.f32.mrf.mxu0
        %v1294 = vadd.f32 %v1245, %v1293
        %v1295 = vpop.f32.mrf.mxu0
        %v1296 = vadd.f32 %v1247, %v1295
        %1297 = vmatmul.bf16.gmra.mxu0 %v907
        %v1298 = vpop.f32.mrf.mxu0
        %v1299 = vadd.f32 %v1250, %v1298
        %v1300 = vpop.f32.mrf.mxu0
        %v1301 = vadd.f32 %v1252, %v1300
        %1302 = vdwg.mxu0
        %v1303 = vmax.f32 %v1166, 0.0
        %v1304 = vmax.f32 %v1264, 0.0
        %v1305 = vmax.f32 %v1168, 0.0
        %v1306 = vmax.f32 %v1266, 0.0
        %v1307 = vmax.f32 %v1171, 0.0
        %v1308 = vmax.f32 %v1269, 0.0
        %v1309 = vmax.f32 %v1173, 0.0
        %v1310 = vmax.f32 %v1271, 0.0
        %v1311 = vmax.f32 %v1176, 0.0
        %v1312 = vmax.f32 %v1274, 0.0
        %v1313 = vmax.f32 %v1178, 0.0
        %v1314 = vmax.f32 %v1276, 0.0
        %v1315 = vmax.f32 %v1181, 0.0
        %v1316 = vmax.f32 %v1279, 0.0
        %v1317 = vmax.f32 %v1183, 0.0
        %v1318 = vmax.f32 %v1281, 0.0
        %v1319 = vmax.f32 %v1186, 0.0
        %v1320 = vmax.f32 %v1284, 0.0
        %v1321 = vmax.f32 %v1188, 0.0
        %v1322 = vmax.f32 %v1286, 0.0
        %v1323 = vmax.f32 %v1191, 0.0
        %v1324 = vmax.f32 %v1289, 0.0
        %v1325 = vmax.f32 %v1193, 0.0
        %v1326 = vmax.f32 %v1291, 0.0
        %v1327 = vmax.f32 %v1196, 0.0
        %v1328 = vmax.f32 %v1294, 0.0
        %v1329 = vmax.f32 %v1198, 0.0
        %v1330 = vmax.f32 %v1296, 0.0
        %v1331 = vmax.f32 %v1201, 0.0
        %v1332 = vmax.f32 %v1299, 0.0
        %v1333 = vmax.f32 %v1203, 0.0
        %v1334 = vmax.f32 %v1301, 0.0
        %v1335 = vld [vmem:[#allocation8] sm:$0xff]
        %v1336 = vld [vmem:[#allocation8 + $0x8] sm:$0xff]
        %v1337 = vld [vmem:[#allocation8 + $0x10] sm:$0xff]
        %v1338 = vld [vmem:[#allocation8 + $0x18] sm:$0xff]
        %v1339 = vmul.f32 %v1303, %v1335
        %v1340 = vmul.f32 %v1304, %v1336
        %v1341 = vmul.f32 %v1305, %v1337
        %v1342 = vmul.f32 %v1306, %v1338
        %v1343 = vmul.f32 %v1307, %v1335
        %v1344 = vmul.f32 %v1308, %v1336
        %v1345 = vmul.f32 %v1309, %v1337
        %v1346 = vmul.f32 %v1310, %v1338
        %v1347 = vmul.f32 %v1311, %v1335
        %v1348 = vmul.f32 %v1312, %v1336
        %v1349 = vmul.f32 %v1313, %v1337
        %v1350 = vmul.f32 %v1314, %v1338
        %v1351 = vmul.f32 %v1315, %v1335
        %v1352 = vmul.f32 %v1316, %v1336
        %v1353 = vmul.f32 %v1317, %v1337
        %v1354 = vmul.f32 %v1318, %v1338
        %v1355 = vmul.f32 %v1319, %v1335
        %v1356 = vmul.f32 %v1320, %v1336
        %v1357 = vmul.f32 %v1321, %v1337
        %v1358 = vmul.f32 %v1322, %v1338
        %v1359 = vmul.f32 %v1323, %v1335
        %v1360 = vmul.f32 %v1324, %v1336
        %v1361 = vmul.f32 %v1325, %v1337
        %v1362 = vmul.f32 %v1326, %v1338
        %v1363 = vmul.f32 %v1327, %v1335
        %v1364 = vmul.f32 %v1328, %v1336
        %v1365 = vmul.f32 %v1329, %v1337
        %v1366 = vmul.f32 %v1330, %v1338
        %v1367 = vmul.f32 %v1331, %v1335
        %v1368 = vmul.f32 %v1332, %v1336
        %v1369 = vmul.f32 %v1333, %v1337
        %v1370 = vmul.f32 %v1334, %v1338
        %v1371 = vadd.f32 %v1339, %v1341
        %v1372 = vrot.slane %v1371, 4
        %v1373 = vadd.f32 %v1371, %v1372
        %v1374 = vrot.slane %v1373, 2
        %v1375 = vadd.f32 %v1373, %v1374
        %v1376 = vrot.slane %v1375, 1
        %v1377 = vadd.f32 %v1375, %v1376
        %v1378 = vadd.f32 %v1340, %v1342
        %v1379 = vrot.slane %v1378, 4
        %v1380 = vadd.f32 %v1378, %v1379
        %v1381 = vrot.slane %v1380, 2
        %v1382 = vadd.f32 %v1380, %v1381
        %v1383 = vrot.slane %v1382, 1
        %v1384 = vadd.f32 %v1382, %v1383
        %v1385 = vadd.f32 %v1343, %v1345
        %v1386 = vrot.slane %v1385, 4
        %v1387 = vadd.f32 %v1385, %v1386
        %v1388 = vrot.slane %v1387, 2
        %v1389 = vadd.f32 %v1387, %v1388
        %v1390 = vrot.slane %v1389, 1
        %v1391 = vadd.f32 %v1389, %v1390
        %v1392 = vadd.f32 %v1344, %v1346
        %v1393 = vrot.slane %v1392, 4
        %v1394 = vadd.f32 %v1392, %v1393
        %v1395 = vrot.slane %v1394, 2
        %v1396 = vadd.f32 %v1394, %v1395
        %v1397 = vrot.slane %v1396, 1
        %v1398 = vadd.f32 %v1396, %v1397
        %v1399 = vadd.f32 %v1347, %v1349
        %v1400 = vrot.slane %v1399, 4
        %v1401 = vadd.f32 %v1399, %v1400
        %v1402 = vrot.slane %v1401, 2
        %v1403 = vadd.f32 %v1401, %v1402
        %v1404 = vrot.slane %v1403, 1
        %v1405 = vadd.f32 %v1403, %v1404
        %v1406 = vadd.f32 %v1348, %v1350
        %v1407 = vrot.slane %v1406, 4
        %v1408 = vadd.f32 %v1406, %v1407
        %v1409 = vrot.slane %v1408, 2
        %v1410 = vadd.f32 %v1408, %v1409
        %v1411 = vrot.slane %v1410, 1
        %v1412 = vadd.f32 %v1410, %v1411
        %v1413 = vadd.f32 %v1351, %v1353
        %v1414 = vrot.slane %v1413, 4
        %v1415 = vadd.f32 %v1413, %v1414
        %v1416 = vrot.slane %v1415, 2
        %v1417 = vadd.f32 %v1415, %v1416
        %v1418 = vrot.slane %v1417, 1
        %v1419 = vadd.f32 %v1417, %v1418
        %v1420 = vadd.f32 %v1352, %v1354
        %v1421 = vrot.slane %v1420, 4
        %v1422 = vadd.f32 %v1420, %v1421
        %v1423 = vrot.slane %v1422, 2
        %v1424 = vadd.f32 %v1422, %v1423
        %v1425 = vrot.slane %v1424, 1
        %v1426 = vadd.f32 %v1424, %v1425
        %v1427 = vadd.f32 %v1355, %v1357
        %v1428 = vrot.slane %v1427, 4
        %v1429 = vadd.f32 %v1427, %v1428
        %v1430 = vrot.slane %v1429, 2
        %v1431 = vadd.f32 %v1429, %v1430
        %v1432 = vrot.slane %v1431, 1
        %v1433 = vadd.f32 %v1431, %v1432
        %v1434 = vadd.f32 %v1356, %v1358
        %v1435 = vrot.slane %v1434, 4
        %v1436 = vadd.f32 %v1434, %v1435
        %v1437 = vrot.slane %v1436, 2
        %v1438 = vadd.f32 %v1436, %v1437
        %v1439 = vrot.slane %v1438, 1
        %v1440 = vadd.f32 %v1438, %v1439
        %v1441 = vadd.f32 %v1359, %v1361
        %v1442 = vrot.slane %v1441, 4
        %v1443 = vadd.f32 %v1441, %v1442
        %v1444 = vrot.slane %v1443, 2
        %v1445 = vadd.f32 %v1443, %v1444
        %v1446 = vrot.slane %v1445, 1
        %v1447 = vadd.f32 %v1445, %v1446
        %v1448 = vadd.f32 %v1360, %v1362
        %v1449 = vrot.slane %v1448, 4
        %v1450 = vadd.f32 %v1448, %v1449
        %v1451 = vrot.slane %v1450, 2
        %v1452 = vadd.f32 %v1450, %v1451
        %v1453 = vrot.slane %v1452, 1
        %v1454 = vadd.f32 %v1452, %v1453
        %v1455 = vadd.f32 %v1363, %v1365
        %v1456 = vrot.slane %v1455, 4
        %v1457 = vadd.f32 %v1455, %v1456
        %v1458 = vrot.slane %v1457, 2
        %v1459 = vadd.f32 %v1457, %v1458
        %v1460 = vrot.slane %v1459, 1
        %v1461 = vadd.f32 %v1459, %v1460
        %v1462 = vadd.f32 %v1364, %v1366
        %v1463 = vrot.slane %v1462, 4
        %v1464 = vadd.f32 %v1462, %v1463
        %v1465 = vrot.slane %v1464, 2
        %v1466 = vadd.f32 %v1464, %v1465
        %v1467 = vrot.slane %v1466, 1
        %v1468 = vadd.f32 %v1466, %v1467
        %v1469 = vadd.f32 %v1367, %v1369
        %v1470 = vrot.slane %v1469, 4
        %v1471 = vadd.f32 %v1469, %v1470
        %v1472 = vrot.slane %v1471, 2
        %v1473 = vadd.f32 %v1471, %v1472
        %v1474 = vrot.slane %v1473, 1
        %v1475 = vadd.f32 %v1473, %v1474
        %v1476 = vadd.f32 %v1368, %v1370
        %v1477 = vrot.slane %v1476, 4
        %v1478 = vadd.f32 %v1476, %v1477
        %v1479 = vrot.slane %v1478, 2
        %v1480 = vadd.f32 %v1478, %v1479
        %v1481 = vrot.slane %v1480, 1
        %v1482 = vadd.f32 %v1480, %v1481
        %v1483 = vpack.c.bf16 %v1377, %v1377
        %v1484 = vpack.c.bf16 %v1384, %v1384
        %v1485 = vpack.c.bf16 %v1391, %v1391
        %v1486 = vpack.c.bf16 %v1398, %v1398
        %v1487 = vpack.c.bf16 %v1405, %v1405
        %v1488 = vpack.c.bf16 %v1412, %v1412
        %v1489 = vpack.c.bf16 %v1419, %v1419
        %v1490 = vpack.c.bf16 %v1426, %v1426
        %v1491 = vpack.c.bf16 %v1433, %v1433
        %v1492 = vpack.c.bf16 %v1440, %v1440
        %v1493 = vpack.c.bf16 %v1447, %v1447
        %v1494 = vpack.c.bf16 %v1454, %v1454
        %v1495 = vpack.c.bf16 %v1461, %v1461
        %v1496 = vpack.c.bf16 %v1468, %v1468
        %v1497 = vpack.c.bf16 %v1475, %v1475
        %v1498 = vpack.c.bf16 %v1482, %v1482
        %v1499 = vld [vmem:[#allocation10] sm:$0xf]
        %v1500 = vld [vmem:[#allocation10 + $0x4] sm:$0xf]
        %v1501 = vld [vmem:[#allocation10 + $0x8] sm:$0xf]
        %v1502 = vld [vmem:[#allocation10 + $0xc] sm:$0xf]
        %v1503 = vld [vmem:[#allocation10 + $0x10] sm:$0xf]
        %v1504 = vld [vmem:[#allocation10 + $0x14] sm:$0xf]
        %v1505 = vld [vmem:[#allocation10 + $0x18] sm:$0xf]
        %v1506 = vld [vmem:[#allocation10 + $0x1c] sm:$0xf]
        %v1507 = vld [vmem:[#allocation10 + $0x20] sm:$0xf]
        %v1508 = vld [vmem:[#allocation10 + $0x24] sm:$0xf]
        %v1509 = vld [vmem:[#allocation10 + $0x28] sm:$0xf]
        %v1510 = vld [vmem:[#allocation10 + $0x2c] sm:$0xf]
        %v1511 = vld [vmem:[#allocation10 + $0x30] sm:$0xf]
        %v1512 = vld [vmem:[#allocation10 + $0x34] sm:$0xf]
        %v1513 = vld [vmem:[#allocation10 + $0x38] sm:$0xf]
        %v1514 = vld [vmem:[#allocation10 + $0x3c] sm:$0xf]
        %v1515 = vld [vmem:[#allocation10 + $0x40] sm:$0xf]
        %v1516 = vld [vmem:[#allocation10 + $0x44] sm:$0xf]
        %v1517 = vld [vmem:[#allocation10 + $0x48] sm:$0xf]
        %v1518 = vld [vmem:[#allocation10 + $0x4c] sm:$0xf]
        %v1519 = vld [vmem:[#allocation10 + $0x50] sm:$0xf]
        %v1520 = vld [vmem:[#allocation10 + $0x54] sm:$0xf]
        %v1521 = vld [vmem:[#allocation10 + $0x58] sm:$0xf]
        %v1522 = vld [vmem:[#allocation10 + $0x5c] sm:$0xf]
        %v1523 = vld [vmem:[#allocation10 + $0x60] sm:$0xf]
        %v1524 = vld [vmem:[#allocation10 + $0x64] sm:$0xf]
        %v1525 = vld [vmem:[#allocation10 + $0x68] sm:$0xf]
        %v1526 = vld [vmem:[#allocation10 + $0x6c] sm:$0xf]
        %v1527 = vld [vmem:[#allocation10 + $0x70] sm:$0xf]
        %v1528 = vld [vmem:[#allocation10 + $0x74] sm:$0xf]
        %v1529 = vld [vmem:[#allocation10 + $0x78] sm:$0xf]
        %v1530 = vld [vmem:[#allocation10 + $0x7c] sm:$0xf]
        %v1531 = vld [vmem:[%s5] sm:$0x1]
        %v1533 = vperm.slane %v1531, 0
        %v1551 = vunpack.c.l.b16 %v1483
        %v1552 = vunpack.c.l.b16 %v1484
        %v1553 = vunpack.c.l.b16 %v1485
        %v1554 = vunpack.c.l.b16 %v1486
        %v1555 = vunpack.c.l.b16 %v1487
        %v1556 = vunpack.c.l.b16 %v1488
        %v1557 = vunpack.c.l.b16 %v1489
        %v1558 = vunpack.c.l.b16 %v1490
        %v1559 = vunpack.c.l.b16 %v1491
        %v1560 = vunpack.c.l.b16 %v1492
        %v1561 = vunpack.c.l.b16 %v1493
        %v1562 = vunpack.c.l.b16 %v1494
        %v1563 = vunpack.c.l.b16 %v1495
        %v1564 = vunpack.c.l.b16 %v1496
        %v1565 = vunpack.c.l.b16 %v1497
        %v1566 = vunpack.c.l.b16 %v1498
        %vm1567 = vcmask 1041409
        %v1568 = vsel %vm1567, %v1553, %v1551
        %vm1569 = vcmask 1042434
        %v1570 = vsel %vm1569, %v1555, %v1568
        %vm1571 = vcmask 1043459
        %v1572 = vsel %vm1571, %v1557, %v1570
        %vm1573 = vcmask 1044484
        %v1574 = vsel %vm1573, %v1559, %v1572
        %vm1575 = vcmask 1045509
        %v1576 = vsel %vm1575, %v1561, %v1574
        %vm1577 = vcmask 1046534
        %v1578 = vsel %vm1577, %v1563, %v1576
        %vm1579 = vcmask 1047559
        %v1580 = vsel %vm1579, %v1565, %v1578
        %v1581 = vsel %vm1567, %v1554, %v1552
        %v1582 = vsel %vm1569, %v1556, %v1581
        %v1583 = vsel %vm1571, %v1558, %v1582
        %v1584 = vsel %vm1573, %v1560, %v1583
        %v1585 = vsel %vm1575, %v1562, %v1584
        %v1586 = vsel %vm1577, %v1564, %v1585
        %v1587 = vsel %vm1579, %v1566, %v1586
        %v1588 = vpack.c.b16 %v1580, %v1580
        %v1589 = vpack.c.b16 %v1587, %v1587
        %v1624 = vunpack.c.l.b16 %v1499
        %v1625 = vunpack.c.l.b16 %v1500
        %v1626 = vunpack.c.l.b16 %v1501
        %v1627 = vunpack.c.l.b16 %v1502
        %v1628 = vunpack.c.l.b16 %v1503
        %v1629 = vunpack.c.l.b16 %v1504
        %v1630 = vunpack.c.l.b16 %v1505
        %v1631 = vunpack.c.l.b16 %v1506
        %v1632 = vunpack.c.l.b16 %v1507
        %v1633 = vunpack.c.l.b16 %v1508
        %v1634 = vunpack.c.l.b16 %v1509
        %v1635 = vunpack.c.l.b16 %v1510
        %v1636 = vunpack.c.l.b16 %v1511
        %v1637 = vunpack.c.l.b16 %v1512
        %v1638 = vunpack.c.l.b16 %v1513
        %v1639 = vunpack.c.l.b16 %v1514
        %v1640 = vunpack.c.l.b16 %v1515
        %v1641 = vunpack.c.l.b16 %v1516
        %v1642 = vunpack.c.l.b16 %v1517
        %v1643 = vunpack.c.l.b16 %v1518
        %v1644 = vunpack.c.l.b16 %v1519
        %v1645 = vunpack.c.l.b16 %v1520
        %v1646 = vunpack.c.l.b16 %v1521
        %v1647 = vunpack.c.l.b16 %v1522
        %v1648 = vunpack.c.l.b16 %v1523
        %v1649 = vunpack.c.l.b16 %v1524
        %v1650 = vunpack.c.l.b16 %v1525
        %v1651 = vunpack.c.l.b16 %v1526
        %v1652 = vunpack.c.l.b16 %v1527
        %v1653 = vunpack.c.l.b16 %v1528
        %v1654 = vunpack.c.l.b16 %v1529
        %v1655 = vunpack.c.l.b16 %v1530
        %v1656 = vpack.c.b16 %v1625, %v1624
        %v1657 = vpack.c.b16 %v1627, %v1626
        %v1658 = vpack.c.b16 %v1629, %v1628
        %v1659 = vpack.c.b16 %v1631, %v1630
        %v1660 = vpack.c.b16 %v1633, %v1632
        %v1661 = vpack.c.b16 %v1635, %v1634
        %v1662 = vpack.c.b16 %v1637, %v1636
        %v1663 = vpack.c.b16 %v1639, %v1638
        %v1664 = vpack.c.b16 %v1641, %v1640
        %v1665 = vpack.c.b16 %v1643, %v1642
        %v1666 = vpack.c.b16 %v1645, %v1644
        %v1667 = vpack.c.b16 %v1647, %v1646
        %v1668 = vpack.c.b16 %v1649, %v1648
        %v1669 = vpack.c.b16 %v1651, %v1650
        %v1670 = vpack.c.b16 %v1653, %v1652
        %v1671 = vpack.c.b16 %v1655, %v1654
        %1688 = vmatpush.bf16.msra.mxu0 %v1663
        %1689 = vmatpush.bf16.msra.mxu0 %v1662
        %1690 = vmatpush.bf16.msra.mxu0 %v1661
        %1691 = vmatpush.bf16.msra.mxu0 %v1660
        %1692 = vmatpush.bf16.msra.mxu0 %v1659
        %1693 = vmatpush.bf16.msra.mxu0 %v1658
        %1694 = vmatpush.bf16.msra.mxu0 %v1657
        %1695 = vmatpush.bf16.msra.mxu0 %v1656
        %1696 = vmatmul.bf16.gmra.mxu0 %v1588
        %v1697 = vpop.f32.mrf.mxu0
        %v1698 = vadd.f32 %v1533, %v1697
        %v1699 = vpop.f32.mrf.mxu0
        %1700 = vdwg.mxu0
        %1701 = vmatpush.bf16.msra.mxu0 %v1671
        %1702 = vmatpush.bf16.msra.mxu0 %v1670
        %1703 = vmatpush.bf16.msra.mxu0 %v1669
        %1704 = vmatpush.bf16.msra.mxu0 %v1668
        %1705 = vmatpush.bf16.msra.mxu0 %v1667
        %1706 = vmatpush.bf16.msra.mxu0 %v1666
        %1707 = vmatpush.bf16.msra.mxu0 %v1665
        %1708 = vmatpush.bf16.msra.mxu0 %v1664
        %1709 = vmatmul.bf16.gmra.mxu0 %v1589
        %v1710 = vpop.f32.mrf.mxu0
        %v1711 = vadd.f32 %v1698, %v1710
        %v1712 = vpop.f32.mrf.mxu0
        %1713 = vdwg.mxu0
        %1714 = vst [vmem:[%s336] sm:$0xff] %v1711
        %s1715 = sand.u32 %s164, 1
        %s1716 = scalar_lea.sflag [#allocation4], %s1715
        %s1717 = sand.u32 %s164, 1
        %s1718 = smul.addr %s1717, 8
        %s1719 = scalar_lea.vmem [#allocation11], %s1718
        // Predicated region
        $region65: #{tpu_custom_call.1} parent=43 // pred_check
          %p1720 = pneg %p174
        $region66: #{tpu_custom_call.1} parent=43 // pred_check_branch
          %1722 = sbr.rel (%p1720) target = $region68
        $region67: #{tpu_custom_call.1} parent=43 // pred_region
          %1724 = vsyncadd %s1716, 0
          %s1725 = smul.addr %s25, 8
          %s1726 = scalar_lea.hbm %s6, %s1725
          %s1728 = sshll.u32 %s1719, 4
          %s1729 = int_to_ptr.vmem [resolvable:$true] %s1728
          %s1730 = sshll.u32 %s1726, 4
          %s1731 = int_to_ptr.hbm [resolvable:$true] %s1730
          %1733 = dma.vmem_to_hbm [thread:$0]  %s1729, 128, %s1731, %s1716
        $region68: #{tpu_custom_call.1} parent=43 // pred_fallthru
          _
      $region44: #{tpu_custom_call.1} parent=5 // pred_fallthru
        _
      %p1734 = scmp.le.s32.totalorder 2, %s20
      // Predicated region
      $region69: #{tpu_custom_call.1} parent=5 // pred_check
        %p1735 = pneg %p1734
      $region70: #{tpu_custom_call.1} parent=5 // pred_check_branch
        %1737 = sbr.rel (%p1735) target = $region72
      $region71: #{tpu_custom_call.1} parent=5 // pred_region
        %s1738 = ssub.s32 %s20, 2
        // Predicated region
        $region73: #{tpu_custom_call.1} parent=71 // pred_check
          %p1739 = pneg %p180
        $region74: #{tpu_custom_call.1} parent=71 // pred_check_branch
          %1741 = sbr.rel (%p1739) target = $region76
        $region75: #{tpu_custom_call.1} parent=71 // pred_region
          %s1742 = sand.u32 %s165, 1
          %s1743 = scalar_lea.sflag [#allocation4], %s1742
          %s1744 = sand.u32 %s165, 1
          %s1745 = smul.addr %s1744, 8
          %s1746 = scalar_lea.vmem [#allocation11], %s1745
          %1748 = dma.done %s1743, 128
        $region76: #{tpu_custom_call.1} parent=71 // pred_fallthru
          _
      $region72: #{tpu_custom_call.1} parent=5 // pred_fallthru
        _
    $region6: #{tpu_custom_call.1} parent=1 // loop_footer
      %s24 = sadd.s32 1, %s20
    $region7: #{tpu_custom_call.1} parent=1 // loop_footer_branch
      %19 = sbr.rel target = $region3
    $region8: #{tpu_custom_call.1} parent=1 // loop_exit
      _
    %1749 = vsyncpa [#allocation3], 1
    %s1750 = scalar_lea.sflag [#allocation3], 1
    %1751 = vsyncpa %s1750, 1
    %1752 = vsyncpa [#allocation6], 1
    %1753 = vsyncpa [#allocation9], 1
    %1754 = vsyncpa [#allocation4], 1
    %s1755 = scalar_lea.sflag [#allocation4], 1
    %1756 = vsyncpa %s1755, 1

</llo_original>
